<compile_context>
chip_gen: v7x
topology: tpu7x:2x2x1
jax: 0.10.0
libtpu: 0.0.40
codegen_flags: <defaults>
</compile_context>

<pallas_src>
import functools

import jax
import jax.numpy as jnp
from jax.experimental import pallas as pl
from jax.experimental.pallas import tpu as pltpu

# ------------------------- configuration (small synthetic shapes) -------------------
B = 2            # batch
T = 16           # raw frames
F_DIM = 32       # speech feature dim
D_ENC = 32       # encoder / profile dim
MAX_N_SPEAKER = 4
MAX_OLP_SPEAKER = 2
LAYERS_IN_BLOCK = (1,)                      # soap_encoder.layers_in_block
SUBSAMPLING = 2 * len(LAYERS_IN_BLOCK)      # = 2
GUIDANCE_LOSS_WEIGHT = 0.5
TP = T // SUBSAMPLING                       # frames after subsampling
N_GATES = 4                                 # LSTM gates i, f, g, o


def build_mapping_dict(max_n, max_olp):
    mapping = {}
    idx = 0
    for p in range(2 ** max_n):
        if bin(p).count("1") <= max_olp:
            mapping[p] = idx
            idx += 1
    mapping["oov"] = idx
    return mapping


MAPPING_DICT = build_mapping_dict(MAX_N_SPEAKER, MAX_OLP_SPEAKER)
NUM_CLASSES = MAPPING_DICT["oov"] + 1       # = LSTM hidden size (oov + 1)
H = NUM_CLASSES                             # = 12 for (4, 2)


# ------------------------- fused kernel ---------------------------------------------
def _bce_with_logits(z, y):
    # binary_cross_entropy(sigmoid(z), y) == softplus(z) - y*z, stable form.
    return jnp.maximum(z, 0.0) - z * y + jnp.log(1.0 + jnp.exp(-jnp.abs(z)))


def soap_fused_kernel(minlen_ref,                         # scalar-prefetch SMEM (B,)
                      sp_ref, prof_ref,                   # (B,TP,F), (B,N,D)
                      wenc_ref, benc_ref, wcicd_ref,      # (F,D), (1,D), (D,2D)
                      wih_ref, whh_ref, bias_ref,         # (2N,4H), (H,4H), (1,4H)
                      lab_ref, pse_ref,                   # (B,TP,N) f32, (B,TP,1) i32
                      loss_ref, logits_ref,               # (1,1), (B,TP,H)
                      *, guidance_weight):
    f32 = jnp.float32
    bf16 = jnp.bfloat16
    B_, TP_, F_ = sp_ref.shape
    N_ = prof_ref.shape[1]
    D_ = wenc_ref.shape[1]
    H_ = whh_ref.shape[0]

    # ---- hoisted weight loads / casts (once, above all loops) ---------------------
    w_enc = wenc_ref[...].astype(bf16)          # (F, D)
    b_enc = benc_ref[...]                       # (1, D)  f32
    w_cicd = wcicd_ref[...].astype(bf16)        # (D, 2D)
    w_ih = wih_ref[...].astype(bf16)            # (2N, 4H) gate-stacked along lanes
    w_hh = whh_ref[...].astype(bf16)            # (H, 4H)  gate-stacked along lanes
    bias = bias_ref[...]                        # (1, 4H)  f32

    # ---- stage 1: encoder + ci/cd scorers, batch flattened into the M dim ---------
    sp_flat = sp_ref[...].reshape(B_ * TP_, F_).astype(bf16)
    enc = jnp.dot(sp_flat, w_enc, preferred_element_type=f32) + b_enc      # (B*TP, D)
    proj = jnp.dot(enc.astype(bf16), w_cicd, preferred_element_type=f32)   # (B*TP, 2D)
    ci_proj = proj[:, :D_]
    cd_proj = jnp.tanh(proj[:, D_:])

    guide_sum = 0.0
    x_rows = []       # per batch: (TP, 2N) LSTM input = [sigmoid(ci_z) | sigmoid(cd_z)]
    masks_sc = []     # per batch: (TP, 1)  frame mask * (1/len)
    dn = (((1,), (1,)), ((), ()))               # contract the feature dim D
    for b in range(B_):
        # one scorer matmul per batch on sublane-stacked [ci_proj ; cd_proj]
        pcb = jnp.concatenate(
            [ci_proj[b * TP_:(b + 1) * TP_], cd_proj[b * TP_:(b + 1) * TP_]], axis=0)
        z_b = jax.lax.dot_general(pcb.astype(bf16), prof_ref[b].astype(bf16), dn,
                                  preferred_element_type=f32)              # (2TP, N)
        sig_b = jax.nn.sigmoid(z_b)

        # frame mask & 1/len computed in-kernel from SMEM scalars (zero-guarded)
        len_b = jnp.maximum(minlen_ref[b], 1)
        mask_b = (jax.lax.broadcasted_iota(jnp.int32, (TP_, 1), 0) < len_b).astype(f32)
        inv_b = 1.0 / len_b.astype(f32)
        masks_sc.append(mask_b * inv_b)

        # guidance BCE in logits space on the stacked ci/cd rows
        lab_b = lab_ref[b]                                                  # (TP, N)
        lab2 = jnp.concatenate([lab_b, lab_b], axis=0)
        mask2 = jnp.concatenate([mask_b, mask_b], axis=0)
        guide_sum = guide_sum + jnp.sum(_bce_with_logits(z_b, lab2) * mask2) * inv_b / N_

        # LSTM input x = [ci | cd] per frame (lane concat, outside the recurrence)
        x_rows.append(jnp.concatenate([sig_b[:TP_], sig_b[TP_:]], axis=1))  # (TP, 2N)

    # hoisted LSTM input projection: ONE matmul for all frames/batches; rows are
    # TIME-MAJOR (row = t*B + b) so each recurrence step slices contiguously.
    x_tm = jnp.stack(x_rows, axis=1).reshape(B_ * TP_, 2 * N_)              # (B*TP, 2N)
    gx_tm = jnp.dot(x_tm.astype(bf16), w_ih, preferred_element_type=f32) + bias  # (B*TP, 4H)

    # ---- stage 2: LSTM recurrence, fully unrolled, ONE matmul per step -------------
    h = jnp.zeros((B_, H_), f32)
    c = jnp.zeros((B_, H_), f32)
    h_steps = []
    for t in range(TP_):                        # TP is static -> full unroll
        pre = gx_tm[t * B_:(t + 1) * B_, :] + jnp.dot(
            h.astype(bf16), w_hh, preferred_element_type=f32)               # (B, 4H)
        i_t = jax.nn.sigmoid(pre[:, 0 * H_:1 * H_])
        f_t = jax.nn.sigmoid(pre[:, 1 * H_:2 * H_])
        g_t = jnp.tanh(pre[:, 2 * H_:3 * H_])
        o_t = jax.nn.sigmoid(pre[:, 3 * H_:4 * H_])
        c = f_t * c + i_t * g_t
        h = o_t * jnp.tanh(c)
        h_steps.append(h)

    logits = jnp.stack(h_steps, axis=1)                                     # (B, TP, H)
    logits_ref[...] = logits                    # ONE dense store after the loop

    # ---- stage 3: masked cross-entropy over powerset labels (from register value) --
    pse = pse_ref[...]                                                      # (B, TP, 1)
    onehot = (jax.lax.broadcasted_iota(jnp.int32, (B_, TP_, H_), 2) == pse).astype(f32)
    m = jnp.max(logits, axis=-1, keepdims=True)
    lse = m + jnp.log(jnp.sum(jnp.exp(logits - m), axis=-1, keepdims=True))
    picked = jnp.sum(logits * onehot, axis=-1, keepdims=True)
    mask_all = jnp.stack(masks_sc, axis=0)                                  # (B, TP, 1)
    ce_sum = jnp.sum((lse - picked) * mask_all)

    loss = ce_sum / B_ + guidance_weight * (guide_sum / B_)
    loss_ref[...] = jnp.reshape(loss, (1, 1))


def run_soap_fused(min_len, speech_sub, profiles, params, binary_sub, pse_labels3):
    N = profiles.shape[1]
    kern = functools.partial(soap_fused_kernel, guidance_weight=GUIDANCE_LOSS_WEIGHT)
    grid_spec = pltpu.PrefetchScalarGridSpec(
        num_scalar_prefetch=1,                            # min_len -> SMEM
        grid=(1,),
        in_specs=[
            pl.BlockSpec((B, TP, F_DIM), lambda i, ml: (0, 0, 0)),
            pl.BlockSpec((B, N, D_ENC), lambda i, ml: (0, 0, 0)),
            pl.BlockSpec((F_DIM, D_ENC), lambda i, ml: (0, 0)),
            pl.BlockSpec((1, D_ENC), lambda i, ml: (0, 0)),
            pl.BlockSpec((D_ENC, 2 * D_ENC), lambda i, ml: (0, 0)),
            pl.BlockSpec((2 * N, N_GATES * H), lambda i, ml: (0, 0)),
            pl.BlockSpec((H, N_GATES * H), lambda i, ml: (0, 0)),
            pl.BlockSpec((1, N_GATES * H), lambda i, ml: (0, 0)),
            pl.BlockSpec((B, TP, N), lambda i, ml: (0, 0, 0)),
            pl.BlockSpec((B, TP, 1), lambda i, ml: (0, 0, 0)),
        ],
        out_specs=(
            pl.BlockSpec((1, 1), lambda i, ml: (0, 0)),
            pl.BlockSpec((B, TP, H), lambda i, ml: (0, 0, 0)),
        ),
    )
    loss, logits = pl.pallas_call(
        kern,
        out_shape=(jax.ShapeDtypeStruct((1, 1), jnp.float32),
                   jax.ShapeDtypeStruct((B, TP, H), jnp.float32)),
        grid_spec=grid_spec,
        compiler_params=pltpu.CompilerParams(dimension_semantics=("arbitrary",)),
    )(min_len, speech_sub, profiles,
      params["w_enc"], params["b_enc"], params["w_cicd"],
      params["wih"], params["whh"], params["lstm_bias"],
      binary_sub, pse_labels3)
    return loss[0, 0], logits


# ------------------------- glue: full SOAP forward ----------------------------------
def create_powerlabel(binary_sub):
    """binary_sub: (B, TP, N) 0/1 floats -> (B, TP) int32 powerset class ids."""
    bits = binary_sub.astype(jnp.int32)
    weights = (2 ** jnp.arange(MAX_N_SPEAKER, dtype=jnp.int32))
    pattern = jnp.sum(bits * weights, axis=-1)                     # (B, TP)
    lut = jnp.array(
        [MAPPING_DICT.get(p, MAPPING_DICT["oov"]) for p in range(2 ** MAX_N_SPEAKER)],
        dtype=jnp.int32)
    return jnp.take(lut, pattern)


def soap_forward(params, speech, speech_len, profiles, binary_labels, binary_label_lens):
    # label / feature subsampling (mirrors binary_labels[:, ::subsampling, :])
    binary_sub = binary_labels[:, ::SUBSAMPLING, :]                # (B, TP, N)
    lab_len = binary_label_lens // SUBSAMPLING
    pse_labels = create_powerlabel(binary_sub)                     # (B, TP) int32

    speech_sub = speech[:, ::SUBSAMPLING, :]                       # (B, TP, F)
    enc_len = speech_len // SUBSAMPLING

    min_len = jnp.minimum(enc_len, lab_len).astype(jnp.int32)      # (B,)
    pse_labels3 = pse_labels[..., None].astype(jnp.int32)          # (B, TP, 1)

    loss, logits = run_soap_fused(min_len, speech_sub, profiles, params,
                                  binary_sub, pse_labels3)
    # ragged per-batch lists (new_logits / new_binary_labels) are represented as the
    # full padded tensors plus per-batch valid lengths.
    return loss, logits, binary_sub, min_len


def init_params(key):
    ks = jax.random.split(key, 6)
    s = 0.1
    w_enc = s * jax.random.normal(ks[0], (F_DIM, D_ENC), jnp.float32)
    b_enc = s * jax.random.normal(ks[1], (1, D_ENC), jnp.float32)
    w_ci = s * jax.random.normal(ks[2], (D_ENC, D_ENC), jnp.float32)
    w_cd = s * jax.random.normal(ks[3], (D_ENC, D_ENC), jnp.float32)
    in_dim = 2 * MAX_N_SPEAKER
    # PyTorch nn.LSTM layout: weight_ih (4H, 2N), weight_hh (4H, H), gates [i,f,g,o]
    w_ih = s * jax.random.normal(ks[4], (4 * H, in_dim), jnp.float32)
    w_hh = s * jax.random.normal(ks[5], (4 * H, H), jnp.float32)
    b_ih = jnp.zeros((4 * H,), jnp.float32)
    b_hh = jnp.zeros((4 * H,), jnp.float32)

    # fused ci|cd projection RHS: one stage-1 matmul produces both scorer projections
    w_cicd = jnp.concatenate([w_ci, w_cd], axis=1)                         # (D, 2D)
    # lane-stacked gate layouts (PyTorch gate order i,f,g,o preserved along columns):
    # column g*H + h of wih/whh/bias corresponds to gate g, hidden unit h.
    wih = jnp.transpose(w_ih.reshape(N_GATES, H, in_dim),
                        (2, 0, 1)).reshape(in_dim, N_GATES * H)            # (2N, 4H)
    whh = jnp.transpose(w_hh.reshape(N_GATES, H, H),
                        (2, 0, 1)).reshape(H, N_GATES * H)                 # (H, 4H)
    bias = (b_ih + b_hh).reshape(1, N_GATES * H)                           # (1, 4H)
    return {
        "w_enc": w_enc, "b_enc": b_enc, "w_cicd": w_cicd,
        "wih": wih, "whh": whh, "lstm_bias": bias,
    }


if __name__ == "__main__":
    key = jax.random.PRNGKey(0)
    k_sp, k_prof, k_lab, k_par = jax.random.split(key, 4)

    speech = jax.random.normal(k_sp, (B, T, F_DIM), jnp.float32)
    speech_len = jnp.array([16, 12], jnp.int32)
    profiles = jax.random.normal(k_prof, (B, MAX_N_SPEAKER, D_ENC), jnp.float32)
    binary_labels = jax.random.bernoulli(
        k_lab, 0.3, (B, T, MAX_N_SPEAKER)).astype(jnp.float32)
    binary_label_lens = jnp.array([16, 14], jnp.int32)

    params = init_params(k_par)

    loss, logits, bin_sub, min_len = soap_forward(
        params, speech, speech_len, profiles, binary_labels, binary_label_lens)
    jax.block_until_ready(loss)
    jax.block_until_ready(logits)
    assert logits.shape == (B, TP, H)
    assert bool(jnp.isfinite(loss))
    print("KERNEL_OK")
</pallas_src>

<mosaic_0001>
module attributes {stable_mosaic.version = 11 : i64} {
  func.func @soap_fused_kernel(%arg0: i32, %arg1: memref<2xi32, #tpu.memory_space<smem>>, %arg2: memref<2x8x32xf32, #tpu.memory_space<vmem>>, %arg3: memref<2x4x32xf32, #tpu.memory_space<vmem>>, %arg4: memref<32x32xf32, #tpu.memory_space<vmem>>, %arg5: memref<1x32xf32, #tpu.memory_space<vmem>>, %arg6: memref<32x64xf32, #tpu.memory_space<vmem>>, %arg7: memref<8x48xf32, #tpu.memory_space<vmem>>, %arg8: memref<12x48xf32, #tpu.memory_space<vmem>>, %arg9: memref<1x48xf32, #tpu.memory_space<vmem>>, %arg10: memref<2x8x4xf32, #tpu.memory_space<vmem>>, %arg11: memref<2x8x1xi32, #tpu.memory_space<vmem>>, %arg12: memref<1x1xf32, #tpu.memory_space<vmem>>, %arg13: memref<2x8x12xf32, #tpu.memory_space<vmem>>) attributes {dimension_semantics = [#tpu.dimension_semantics<arbitrary>], iteration_bounds = array<i64: 1>, scalar_prefetch = 1 : i64, scratch_operands = 0 : i64, tpu.core_type = #tpu.core_type<tc>, window_params = [{pipeline_mode = #tpu.pipeline_mode<synchronous>, transform_indices = @transform_0, window_bounds = array<i64: 2, 8, 32>}, {pipeline_mode = #tpu.pipeline_mode<synchronous>, transform_indices = @transform_1, window_bounds = array<i64: 2, 4, 32>}, {pipeline_mode = #tpu.pipeline_mode<synchronous>, transform_indices = @transform_2, window_bounds = array<i64: 32, 32>}, {pipeline_mode = #tpu.pipeline_mode<synchronous>, transform_indices = @transform_3, window_bounds = array<i64: 1, 32>}, {pipeline_mode = #tpu.pipeline_mode<synchronous>, transform_indices = @transform_4, window_bounds = array<i64: 32, 64>}, {pipeline_mode = #tpu.pipeline_mode<synchronous>, transform_indices = @transform_5, window_bounds = array<i64: 8, 48>}, {pipeline_mode = #tpu.pipeline_mode<synchronous>, transform_indices = @transform_6, window_bounds = array<i64: 12, 48>}, {pipeline_mode = #tpu.pipeline_mode<synchronous>, transform_indices = @transform_7, window_bounds = array<i64: 1, 48>}, {pipeline_mode = #tpu.pipeline_mode<synchronous>, transform_indices = @transform_8, window_bounds = array<i64: 2, 8, 4>}, {pipeline_mode = #tpu.pipeline_mode<synchronous>, transform_indices = @transform_9, window_bounds = array<i64: 2, 8, 1>}, {pipeline_mode = #tpu.pipeline_mode<synchronous>, transform_indices = @transform_10, window_bounds = array<i64: 1, 1>}, {pipeline_mode = #tpu.pipeline_mode<synchronous>, transform_indices = @transform_11, window_bounds = array<i64: 2, 8, 12>}]} {
    %c0 = arith.constant 0 : index
    %c0_0 = arith.constant 0 : index
    %0 = vector.load %arg4[%c0, %c0_0] : memref<32x32xf32, #tpu.memory_space<vmem>>, vector<32x32xf32>
    %1 = arith.truncf %0 : vector<32x32xf32> to vector<32x32xbf16>
    %c0_1 = arith.constant 0 : index
    %c0_2 = arith.constant 0 : index
    %2 = vector.load %arg5[%c0_1, %c0_2] : memref<1x32xf32, #tpu.memory_space<vmem>>, vector<1x32xf32>
    %c0_3 = arith.constant 0 : index
    %c0_4 = arith.constant 0 : index
    %3 = vector.load %arg6[%c0_3, %c0_4] : memref<32x64xf32, #tpu.memory_space<vmem>>, vector<32x64xf32>
    %4 = arith.truncf %3 : vector<32x64xf32> to vector<32x64xbf16>
    %c0_5 = arith.constant 0 : index
    %c0_6 = arith.constant 0 : index
    %5 = vector.load %arg7[%c0_5, %c0_6] : memref<8x48xf32, #tpu.memory_space<vmem>>, vector<8x48xf32>
    %6 = arith.truncf %5 : vector<8x48xf32> to vector<8x48xbf16>
    %c0_7 = arith.constant 0 : index
    %c0_8 = arith.constant 0 : index
    %7 = vector.load %arg8[%c0_7, %c0_8] : memref<12x48xf32, #tpu.memory_space<vmem>>, vector<12x48xf32>
    %8 = arith.truncf %7 : vector<12x48xf32> to vector<12x48xbf16>
    %c0_9 = arith.constant 0 : index
    %c0_10 = arith.constant 0 : index
    %9 = vector.load %arg9[%c0_9, %c0_10] : memref<1x48xf32, #tpu.memory_space<vmem>>, vector<1x48xf32>
    %c0_11 = arith.constant 0 : index
    %c0_12 = arith.constant 0 : index
    %c0_13 = arith.constant 0 : index
    %10 = vector.load %arg2[%c0_11, %c0_12, %c0_13] : memref<2x8x32xf32, #tpu.memory_space<vmem>>, vector<2x8x32xf32>
    %11 = vector.shape_cast %10 : vector<2x8x32xf32> to vector<16x32xf32>
    %12 = arith.truncf %11 : vector<16x32xf32> to vector<16x32xbf16>
    %cst = arith.constant dense<0.000000e+00> : vector<16x32xf32>
    %13 = tpu.matmul %12, %1, %cst {dimension_numbers = #tpu.dot_dimension_numbers<[1], [0], [0], [1], [0, 0, 1, 1], [], []>} : vector<16x32xbf16>, vector<32x32xbf16>, vector<16x32xf32> -> vector<16x32xf32>
    %14 = vector.broadcast %2 : vector<1x32xf32> to vector<16x32xf32>
    %15 = arith.addf %13, %14 : vector<16x32xf32>
    %16 = arith.truncf %15 : vector<16x32xf32> to vector<16x32xbf16>
    %cst_14 = arith.constant dense<0.000000e+00> : vector<16x64xf32>
    %17 = tpu.matmul %16, %4, %cst_14 {dimension_numbers = #tpu.dot_dimension_numbers<[1], [0], [0], [1], [0, 0, 1, 1], [], []>} : vector<16x32xbf16>, vector<32x64xbf16>, vector<16x64xf32> -> vector<16x64xf32>
    %18 = vector.extract_strided_slice %17 {offsets = [0, 0], sizes = [16, 32], strides = [1, 1]} : vector<16x64xf32> to vector<16x32xf32>
    %19 = vector.extract_strided_slice %17 {offsets = [0, 32], sizes = [16, 32], strides = [1, 1]} : vector<16x64xf32> to vector<16x32xf32>
    %20 = math.tanh %19 : vector<16x32xf32>
    %21 = vector.extract_strided_slice %18 {offsets = [0, 0], sizes = [8, 32], strides = [1, 1]} : vector<16x32xf32> to vector<8x32xf32>
    %22 = vector.extract_strided_slice %20 {offsets = [0, 0], sizes = [8, 32], strides = [1, 1]} : vector<16x32xf32> to vector<8x32xf32>
    %23 = tpu.concatenate %21, %22 in 0 : vector<8x32xf32>, vector<8x32xf32> -> vector<16x32xf32>
    %24 = arith.truncf %23 : vector<16x32xf32> to vector<16x32xbf16>
    %c0_15 = arith.constant 0 : index
    %c0_16 = arith.constant 0 : index
    %c0_17 = arith.constant 0 : index
    %25 = vector.load %arg3[%c0_15, %c0_16, %c0_17] : memref<2x4x32xf32, #tpu.memory_space<vmem>>, vector<1x4x32xf32>
    %26 = vector.shape_cast %25 : vector<1x4x32xf32> to vector<4x32xf32>
    %27 = arith.truncf %26 : vector<4x32xf32> to vector<4x32xbf16>
    %cst_18 = arith.constant dense<0.000000e+00> : vector<16x4xf32>
    %28 = tpu.matmul %24, %27, %cst_18 {dimension_numbers = #tpu.dot_dimension_numbers<[1], [1], [0], [0], [0, 0, 1, 0], [], []>} : vector<16x32xbf16>, vector<4x32xbf16>, vector<16x4xf32> -> vector<16x4xf32>
    %29 = arith.negf %28 : vector<16x4xf32>
    %30 = math.exp %29 : vector<16x4xf32>
    %cst_19 = arith.constant 1.000000e+00 : f32
    %31 = vector.broadcast %cst_19 : f32 to vector<16x4xf32>
    %32 = arith.addf %31, %30 : vector<16x4xf32>
    %33 = arith.divf %31, %32 : vector<16x4xf32>
    %c0_20 = arith.constant 0 : index
    %34 = memref.load %arg1[%c0_20] : memref<2xi32, #tpu.memory_space<smem>>
    %c1_i32 = arith.constant 1 : i32
    %35 = arith.maxsi %34, %c1_i32 : i32
    %36 = tpu.iota {dimensions = array<i32: 0>} : vector<8x1xi32>
    %37 = vector.broadcast %35 : i32 to vector<8x1xi32>
    %38 = arith.cmpi slt, %36, %37 : vector<8x1xi32>
    %39 = arith.extui %38 : vector<8x1xi1> to vector<8x1xi32>
    %40 = arith.sitofp %39 : vector<8x1xi32> to vector<8x1xf32>
    %41 = arith.sitofp %35 : i32 to f32
    %cst_21 = arith.constant 1.000000e+00 : f32
    %42 = arith.divf %cst_21, %41 : f32
    %43 = vector.broadcast %42 : f32 to vector<8x1xf32>
    %44 = arith.mulf %40, %43 : vector<8x1xf32>
    %c0_22 = arith.constant 0 : index
    %c0_23 = arith.constant 0 : index
    %c0_24 = arith.constant 0 : index
    %45 = vector.load %arg10[%c0_22, %c0_23, %c0_24] : memref<2x8x4xf32, #tpu.memory_space<vmem>>, vector<1x8x4xf32>
    %46 = vector.shape_cast %45 : vector<1x8x4xf32> to vector<8x4xf32>
    %47 = tpu.concatenate %46, %46 in 0 : vector<8x4xf32>, vector<8x4xf32> -> vector<16x4xf32>
    %48 = tpu.concatenate %40, %40 in 0 : vector<8x1xf32>, vector<8x1xf32> -> vector<16x1xf32>
    %cst_25 = arith.constant 0.000000e+00 : f32
    %49 = vector.broadcast %cst_25 : f32 to vector<16x4xf32>
    %50 = arith.maximumf %28, %49 : vector<16x4xf32>
    %51 = arith.mulf %28, %47 : vector<16x4xf32>
    %52 = arith.subf %50, %51 : vector<16x4xf32>
    %53 = math.absf %28 : vector<16x4xf32>
    %cst_26 = arith.constant 0.000000e+00 : f32
    %54 = vector.broadcast %cst_26 : f32 to vector<16x4xf32>
    %55 = arith.subf %54, %53 : vector<16x4xf32>
    %56 = math.exp %55 : vector<16x4xf32>
    %cst_27 = arith.constant 1.000000e+00 : f32
    %57 = vector.broadcast %cst_27 : f32 to vector<16x4xf32>
    %58 = arith.addf %57, %56 : vector<16x4xf32>
    %59 = math.log %58 : vector<16x4xf32>
    %60 = arith.addf %52, %59 : vector<16x4xf32>
    %61 = vector.broadcast %48 : vector<16x1xf32> to vector<16x4xf32>
    %62 = arith.mulf %60, %61 : vector<16x4xf32>
    %63 = vector.shape_cast %62 : vector<16x4xf32> to vector<1x16x4xf32>
    %cst_28 = arith.constant dense<0.000000e+00> : vector<1xf32>
    %64 = vector.multi_reduction <add>, %63, %cst_28 [1, 2] : vector<1x16x4xf32> to vector<1xf32>
    %65 = vector.shape_cast %64 : vector<1xf32> to vector<1x1x1xf32>
    %66 = vector.extract %65[0, 0, 0] : f32 from vector<1x1x1xf32>
    %67 = arith.mulf %66, %42 : f32
    %cst_29 = arith.constant 4.000000e+00 : f32
    %68 = arith.divf %67, %cst_29 : f32
    %cst_30 = arith.constant 0.000000e+00 : f32
    %69 = arith.addf %cst_30, %68 : f32
    %70 = vector.extract_strided_slice %33 {offsets = [0, 0], sizes = [8, 4], strides = [1, 1]} : vector<16x4xf32> to vector<8x4xf32>
    %71 = vector.extract_strided_slice %33 {offsets = [8, 0], sizes = [8, 4], strides = [1, 1]} : vector<16x4xf32> to vector<8x4xf32>
    %72 = tpu.concatenate %70, %71 in 1 : vector<8x4xf32>, vector<8x4xf32> -> vector<8x8xf32>
    %73 = vector.extract_strided_slice %18 {offsets = [8, 0], sizes = [8, 32], strides = [1, 1]} : vector<16x32xf32> to vector<8x32xf32>
    %74 = vector.extract_strided_slice %20 {offsets = [8, 0], sizes = [8, 32], strides = [1, 1]} : vector<16x32xf32> to vector<8x32xf32>
    %75 = tpu.concatenate %73, %74 in 0 : vector<8x32xf32>, vector<8x32xf32> -> vector<16x32xf32>
    %76 = arith.truncf %75 : vector<16x32xf32> to vector<16x32xbf16>
    %c1 = arith.constant 1 : index
    %c0_31 = arith.constant 0 : index
    %c0_32 = arith.constant 0 : index
    %77 = vector.load %arg3[%c1, %c0_31, %c0_32] : memref<2x4x32xf32, #tpu.memory_space<vmem>>, vector<1x4x32xf32>
    %78 = vector.shape_cast %77 : vector<1x4x32xf32> to vector<4x32xf32>
    %79 = arith.truncf %78 : vector<4x32xf32> to vector<4x32xbf16>
    %cst_33 = arith.constant dense<0.000000e+00> : vector<16x4xf32>
    %80 = tpu.matmul %76, %79, %cst_33 {dimension_numbers = #tpu.dot_dimension_numbers<[1], [1], [0], [0], [0, 0, 1, 0], [], []>} : vector<16x32xbf16>, vector<4x32xbf16>, vector<16x4xf32> -> vector<16x4xf32>
    %81 = arith.negf %80 : vector<16x4xf32>
    %82 = math.exp %81 : vector<16x4xf32>
    %cst_34 = arith.constant 1.000000e+00 : f32
    %83 = vector.broadcast %cst_34 : f32 to vector<16x4xf32>
    %84 = arith.addf %83, %82 : vector<16x4xf32>
    %85 = arith.divf %83, %84 : vector<16x4xf32>
    %c1_35 = arith.constant 1 : index
    %86 = memref.load %arg1[%c1_35] : memref<2xi32, #tpu.memory_space<smem>>
    %c1_i32_36 = arith.constant 1 : i32
    %87 = arith.maxsi %86, %c1_i32_36 : i32
    %88 = tpu.iota {dimensions = array<i32: 0>} : vector<8x1xi32>
    %89 = vector.broadcast %87 : i32 to vector<8x1xi32>
    %90 = arith.cmpi slt, %88, %89 : vector<8x1xi32>
    %91 = arith.extui %90 : vector<8x1xi1> to vector<8x1xi32>
    %92 = arith.sitofp %91 : vector<8x1xi32> to vector<8x1xf32>
    %93 = arith.sitofp %87 : i32 to f32
    %cst_37 = arith.constant 1.000000e+00 : f32
    %94 = arith.divf %cst_37, %93 : f32
    %95 = vector.broadcast %94 : f32 to vector<8x1xf32>
    %96 = arith.mulf %92, %95 : vector<8x1xf32>
    %c1_38 = arith.constant 1 : index
    %c0_39 = arith.constant 0 : index
    %c0_40 = arith.constant 0 : index
    %97 = vector.load %arg10[%c1_38, %c0_39, %c0_40] : memref<2x8x4xf32, #tpu.memory_space<vmem>>, vector<1x8x4xf32>
    %98 = vector.shape_cast %97 : vector<1x8x4xf32> to vector<8x4xf32>
    %99 = tpu.concatenate %98, %98 in 0 : vector<8x4xf32>, vector<8x4xf32> -> vector<16x4xf32>
    %100 = tpu.concatenate %92, %92 in 0 : vector<8x1xf32>, vector<8x1xf32> -> vector<16x1xf32>
    %cst_41 = arith.constant 0.000000e+00 : f32
    %101 = vector.broadcast %cst_41 : f32 to vector<16x4xf32>
    %102 = arith.maximumf %80, %101 : vector<16x4xf32>
    %103 = arith.mulf %80, %99 : vector<16x4xf32>
    %104 = arith.subf %102, %103 : vector<16x4xf32>
    %105 = math.absf %80 : vector<16x4xf32>
    %cst_42 = arith.constant 0.000000e+00 : f32
    %106 = vector.broadcast %cst_42 : f32 to vector<16x4xf32>
    %107 = arith.subf %106, %105 : vector<16x4xf32>
    %108 = math.exp %107 : vector<16x4xf32>
    %cst_43 = arith.constant 1.000000e+00 : f32
    %109 = vector.broadcast %cst_43 : f32 to vector<16x4xf32>
    %110 = arith.addf %109, %108 : vector<16x4xf32>
    %111 = math.log %110 : vector<16x4xf32>
    %112 = arith.addf %104, %111 : vector<16x4xf32>
    %113 = vector.broadcast %100 : vector<16x1xf32> to vector<16x4xf32>
    %114 = arith.mulf %112, %113 : vector<16x4xf32>
    %115 = vector.shape_cast %114 : vector<16x4xf32> to vector<1x16x4xf32>
    %cst_44 = arith.constant dense<0.000000e+00> : vector<1xf32>
    %116 = vector.multi_reduction <add>, %115, %cst_44 [1, 2] : vector<1x16x4xf32> to vector<1xf32>
    %117 = vector.shape_cast %116 : vector<1xf32> to vector<1x1x1xf32>
    %118 = vector.extract %117[0, 0, 0] : f32 from vector<1x1x1xf32>
    %119 = arith.mulf %118, %94 : f32
    %cst_45 = arith.constant 4.000000e+00 : f32
    %120 = arith.divf %119, %cst_45 : f32
    %121 = arith.addf %69, %120 : f32
    %122 = vector.extract_strided_slice %85 {offsets = [0, 0], sizes = [8, 4], strides = [1, 1]} : vector<16x4xf32> to vector<8x4xf32>
    %123 = vector.extract_strided_slice %85 {offsets = [8, 0], sizes = [8, 4], strides = [1, 1]} : vector<16x4xf32> to vector<8x4xf32>
    %124 = tpu.concatenate %122, %123 in 1 : vector<8x4xf32>, vector<8x4xf32> -> vector<8x8xf32>
    %125 = vector.shape_cast %72 : vector<8x8xf32> to vector<8x1x8xf32>
    %126 = vector.shape_cast %124 : vector<8x8xf32> to vector<8x1x8xf32>
    %127 = tpu.concatenate %125, %126 in 1 : vector<8x1x8xf32>, vector<8x1x8xf32> -> vector<8x2x8xf32>
    %128 = vector.shape_cast %127 : vector<8x2x8xf32> to vector<16x8xf32>
    %129 = arith.truncf %128 : vector<16x8xf32> to vector<16x8xbf16>
    %cst_46 = arith.constant dense<0.000000e+00> : vector<16x48xf32>
    %130 = tpu.matmul %129, %6, %cst_46 {dimension_numbers = #tpu.dot_dimension_numbers<[1], [0], [0], [1], [0, 0, 1, 1], [], []>} : vector<16x8xbf16>, vector<8x48xbf16>, vector<16x48xf32> -> vector<16x48xf32>
    %131 = vector.broadcast %9 : vector<1x48xf32> to vector<16x48xf32>
    %132 = arith.addf %130, %131 : vector<16x48xf32>
    %cst_47 = arith.constant 0.000000e+00 : f32
    %133 = vector.broadcast %cst_47 : f32 to vector<2x12xf32>
    %cst_48 = arith.constant 0.000000e+00 : f32
    %134 = vector.broadcast %cst_48 : f32 to vector<2x12xf32>
    %135 = vector.extract_strided_slice %132 {offsets = [0, 0], sizes = [2, 48], strides = [1, 1]} : vector<16x48xf32> to vector<2x48xf32>
    %136 = arith.truncf %133 : vector<2x12xf32> to vector<2x12xbf16>
    %cst_49 = arith.constant dense<0.000000e+00> : vector<2x48xf32>
    %137 = tpu.matmul %136, %8, %cst_49 {dimension_numbers = #tpu.dot_dimension_numbers<[1], [0], [0], [1], [0, 0, 1, 1], [], []>} : vector<2x12xbf16>, vector<12x48xbf16>, vector<2x48xf32> -> vector<2x48xf32>
    %138 = arith.addf %135, %137 : vector<2x48xf32>
    %139 = vector.extract_strided_slice %138 {offsets = [0, 0], sizes = [2, 12], strides = [1, 1]} : vector<2x48xf32> to vector<2x12xf32>
    %140 = arith.negf %139 : vector<2x12xf32>
    %141 = math.exp %140 : vector<2x12xf32>
    %cst_50 = arith.constant 1.000000e+00 : f32
    %142 = vector.broadcast %cst_50 : f32 to vector<2x12xf32>
    %143 = arith.addf %142, %141 : vector<2x12xf32>
    %144 = arith.divf %142, %143 : vector<2x12xf32>
    %145 = vector.extract_strided_slice %138 {offsets = [0, 12], sizes = [2, 12], strides = [1, 1]} : vector<2x48xf32> to vector<2x12xf32>
    %146 = arith.negf %145 : vector<2x12xf32>
    %147 = math.exp %146 : vector<2x12xf32>
    %cst_51 = arith.constant 1.000000e+00 : f32
    %148 = vector.broadcast %cst_51 : f32 to vector<2x12xf32>
    %149 = arith.addf %148, %147 : vector<2x12xf32>
    %150 = arith.divf %148, %149 : vector<2x12xf32>
    %151 = vector.extract_strided_slice %138 {offsets = [0, 24], sizes = [2, 12], strides = [1, 1]} : vector<2x48xf32> to vector<2x12xf32>
    %152 = math.tanh %151 : vector<2x12xf32>
    %153 = vector.extract_strided_slice %138 {offsets = [0, 36], sizes = [2, 12], strides = [1, 1]} : vector<2x48xf32> to vector<2x12xf32>
    %154 = arith.negf %153 : vector<2x12xf32>
    %155 = math.exp %154 : vector<2x12xf32>
    %cst_52 = arith.constant 1.000000e+00 : f32
    %156 = vector.broadcast %cst_52 : f32 to vector<2x12xf32>
    %157 = arith.addf %156, %155 : vector<2x12xf32>
    %158 = arith.divf %156, %157 : vector<2x12xf32>
    %159 = arith.mulf %150, %134 : vector<2x12xf32>
    %160 = arith.mulf %144, %152 : vector<2x12xf32>
    %161 = arith.addf %159, %160 : vector<2x12xf32>
    %162 = math.tanh %161 : vector<2x12xf32>
    %163 = arith.mulf %158, %162 : vector<2x12xf32>
    %164 = vector.extract_strided_slice %132 {offsets = [2, 0], sizes = [2, 48], strides = [1, 1]} : vector<16x48xf32> to vector<2x48xf32>
    %165 = arith.truncf %163 : vector<2x12xf32> to vector<2x12xbf16>
    %cst_53 = arith.constant dense<0.000000e+00> : vector<2x48xf32>
    %166 = tpu.matmul %165, %8, %cst_53 {dimension_numbers = #tpu.dot_dimension_numbers<[1], [0], [0], [1], [0, 0, 1, 1], [], []>} : vector<2x12xbf16>, vector<12x48xbf16>, vector<2x48xf32> -> vector<2x48xf32>
    %167 = arith.addf %164, %166 : vector<2x48xf32>
    %168 = vector.extract_strided_slice %167 {offsets = [0, 0], sizes = [2, 12], strides = [1, 1]} : vector<2x48xf32> to vector<2x12xf32>
    %169 = arith.negf %168 : vector<2x12xf32>
    %170 = math.exp %169 : vector<2x12xf32>
    %cst_54 = arith.constant 1.000000e+00 : f32
    %171 = vector.broadcast %cst_54 : f32 to vector<2x12xf32>
    %172 = arith.addf %171, %170 : vector<2x12xf32>
    %173 = arith.divf %171, %172 : vector<2x12xf32>
    %174 = vector.extract_strided_slice %167 {offsets = [0, 12], sizes = [2, 12], strides = [1, 1]} : vector<2x48xf32> to vector<2x12xf32>
    %175 = arith.negf %174 : vector<2x12xf32>
    %176 = math.exp %175 : vector<2x12xf32>
    %cst_55 = arith.constant 1.000000e+00 : f32
    %177 = vector.broadcast %cst_55 : f32 to vector<2x12xf32>
    %178 = arith.addf %177, %176 : vector<2x12xf32>
    %179 = arith.divf %177, %178 : vector<2x12xf32>
    %180 = vector.extract_strided_slice %167 {offsets = [0, 24], sizes = [2, 12], strides = [1, 1]} : vector<2x48xf32> to vector<2x12xf32>
    %181 = math.tanh %180 : vector<2x12xf32>
    %182 = vector.extract_strided_slice %167 {offsets = [0, 36], sizes = [2, 12], strides = [1, 1]} : vector<2x48xf32> to vector<2x12xf32>
    %183 = arith.negf %182 : vector<2x12xf32>
    %184 = math.exp %183 : vector<2x12xf32>
    %cst_56 = arith.constant 1.000000e+00 : f32
    %185 = vector.broadcast %cst_56 : f32 to vector<2x12xf32>
    %186 = arith.addf %185, %184 : vector<2x12xf32>
    %187 = arith.divf %185, %186 : vector<2x12xf32>
    %188 = arith.mulf %179, %161 : vector<2x12xf32>
    %189 = arith.mulf %173, %181 : vector<2x12xf32>
    %190 = arith.addf %188, %189 : vector<2x12xf32>
    %191 = math.tanh %190 : vector<2x12xf32>
    %192 = arith.mulf %187, %191 : vector<2x12xf32>
    %193 = vector.extract_strided_slice %132 {offsets = [4, 0], sizes = [2, 48], strides = [1, 1]} : vector<16x48xf32> to vector<2x48xf32>
    %194 = arith.truncf %192 : vector<2x12xf32> to vector<2x12xbf16>
    %cst_57 = arith.constant dense<0.000000e+00> : vector<2x48xf32>
    %195 = tpu.matmul %194, %8, %cst_57 {dimension_numbers = #tpu.dot_dimension_numbers<[1], [0], [0], [1], [0, 0, 1, 1], [], []>} : vector<2x12xbf16>, vector<12x48xbf16>, vector<2x48xf32> -> vector<2x48xf32>
    %196 = arith.addf %193, %195 : vector<2x48xf32>
    %197 = vector.extract_strided_slice %196 {offsets = [0, 0], sizes = [2, 12], strides = [1, 1]} : vector<2x48xf32> to vector<2x12xf32>
    %198 = arith.negf %197 : vector<2x12xf32>
    %199 = math.exp %198 : vector<2x12xf32>
    %cst_58 = arith.constant 1.000000e+00 : f32
    %200 = vector.broadcast %cst_58 : f32 to vector<2x12xf32>
    %201 = arith.addf %200, %199 : vector<2x12xf32>
    %202 = arith.divf %200, %201 : vector<2x12xf32>
    %203 = vector.extract_strided_slice %196 {offsets = [0, 12], sizes = [2, 12], strides = [1, 1]} : vector<2x48xf32> to vector<2x12xf32>
    %204 = arith.negf %203 : vector<2x12xf32>
    %205 = math.exp %204 : vector<2x12xf32>
    %cst_59 = arith.constant 1.000000e+00 : f32
    %206 = vector.broadcast %cst_59 : f32 to vector<2x12xf32>
    %207 = arith.addf %206, %205 : vector<2x12xf32>
    %208 = arith.divf %206, %207 : vector<2x12xf32>
    %209 = vector.extract_strided_slice %196 {offsets = [0, 24], sizes = [2, 12], strides = [1, 1]} : vector<2x48xf32> to vector<2x12xf32>
    %210 = math.tanh %209 : vector<2x12xf32>
    %211 = vector.extract_strided_slice %196 {offsets = [0, 36], sizes = [2, 12], strides = [1, 1]} : vector<2x48xf32> to vector<2x12xf32>
    %212 = arith.negf %211 : vector<2x12xf32>
    %213 = math.exp %212 : vector<2x12xf32>
    %cst_60 = arith.constant 1.000000e+00 : f32
    %214 = vector.broadcast %cst_60 : f32 to vector<2x12xf32>
    %215 = arith.addf %214, %213 : vector<2x12xf32>
    %216 = arith.divf %214, %215 : vector<2x12xf32>
    %217 = arith.mulf %208, %190 : vector<2x12xf32>
    %218 = arith.mulf %202, %210 : vector<2x12xf32>
    %219 = arith.addf %217, %218 : vector<2x12xf32>
    %220 = math.tanh %219 : vector<2x12xf32>
    %221 = arith.mulf %216, %220 : vector<2x12xf32>
    %222 = vector.extract_strided_slice %132 {offsets = [6, 0], sizes = [2, 48], strides = [1, 1]} : vector<16x48xf32> to vector<2x48xf32>
    %223 = arith.truncf %221 : vector<2x12xf32> to vector<2x12xbf16>
    %cst_61 = arith.constant dense<0.000000e+00> : vector<2x48xf32>
    %224 = tpu.matmul %223, %8, %cst_61 {dimension_numbers = #tpu.dot_dimension_numbers<[1], [0], [0], [1], [0, 0, 1, 1], [], []>} : vector<2x12xbf16>, vector<12x48xbf16>, vector<2x48xf32> -> vector<2x48xf32>
    %225 = arith.addf %222, %224 : vector<2x48xf32>
    %226 = vector.extract_strided_slice %225 {offsets = [0, 0], sizes = [2, 12], strides = [1, 1]} : vector<2x48xf32> to vector<2x12xf32>
    %227 = arith.negf %226 : vector<2x12xf32>
    %228 = math.exp %227 : vector<2x12xf32>
    %cst_62 = arith.constant 1.000000e+00 : f32
    %229 = vector.broadcast %cst_62 : f32 to vector<2x12xf32>
    %230 = arith.addf %229, %228 : vector<2x12xf32>
    %231 = arith.divf %229, %230 : vector<2x12xf32>
    %232 = vector.extract_strided_slice %225 {offsets = [0, 12], sizes = [2, 12], strides = [1, 1]} : vector<2x48xf32> to vector<2x12xf32>
    %233 = arith.negf %232 : vector<2x12xf32>
    %234 = math.exp %233 : vector<2x12xf32>
    %cst_63 = arith.constant 1.000000e+00 : f32
    %235 = vector.broadcast %cst_63 : f32 to vector<2x12xf32>
    %236 = arith.addf %235, %234 : vector<2x12xf32>
    %237 = arith.divf %235, %236 : vector<2x12xf32>
    %238 = vector.extract_strided_slice %225 {offsets = [0, 24], sizes = [2, 12], strides = [1, 1]} : vector<2x48xf32> to vector<2x12xf32>
    %239 = math.tanh %238 : vector<2x12xf32>
    %240 = vector.extract_strided_slice %225 {offsets = [0, 36], sizes = [2, 12], strides = [1, 1]} : vector<2x48xf32> to vector<2x12xf32>
    %241 = arith.negf %240 : vector<2x12xf32>
    %242 = math.exp %241 : vector<2x12xf32>
    %cst_64 = arith.constant 1.000000e+00 : f32
    %243 = vector.broadcast %cst_64 : f32 to vector<2x12xf32>
    %244 = arith.addf %243, %242 : vector<2x12xf32>
    %245 = arith.divf %243, %244 : vector<2x12xf32>
    %246 = arith.mulf %237, %219 : vector<2x12xf32>
    %247 = arith.mulf %231, %239 : vector<2x12xf32>
    %248 = arith.addf %246, %247 : vector<2x12xf32>
    %249 = math.tanh %248 : vector<2x12xf32>
    %250 = arith.mulf %245, %249 : vector<2x12xf32>
    %251 = vector.extract_strided_slice %132 {offsets = [8, 0], sizes = [2, 48], strides = [1, 1]} : vector<16x48xf32> to vector<2x48xf32>
    %252 = arith.truncf %250 : vector<2x12xf32> to vector<2x12xbf16>
    %cst_65 = arith.constant dense<0.000000e+00> : vector<2x48xf32>
    %253 = tpu.matmul %252, %8, %cst_65 {dimension_numbers = #tpu.dot_dimension_numbers<[1], [0], [0], [1], [0, 0, 1, 1], [], []>} : vector<2x12xbf16>, vector<12x48xbf16>, vector<2x48xf32> -> vector<2x48xf32>
    %254 = arith.addf %251, %253 : vector<2x48xf32>
    %255 = vector.extract_strided_slice %254 {offsets = [0, 0], sizes = [2, 12], strides = [1, 1]} : vector<2x48xf32> to vector<2x12xf32>
    %256 = arith.negf %255 : vector<2x12xf32>
    %257 = math.exp %256 : vector<2x12xf32>
    %cst_66 = arith.constant 1.000000e+00 : f32
    %258 = vector.broadcast %cst_66 : f32 to vector<2x12xf32>
    %259 = arith.addf %258, %257 : vector<2x12xf32>
    %260 = arith.divf %258, %259 : vector<2x12xf32>
    %261 = vector.extract_strided_slice %254 {offsets = [0, 12], sizes = [2, 12], strides = [1, 1]} : vector<2x48xf32> to vector<2x12xf32>
    %262 = arith.negf %261 : vector<2x12xf32>
    %263 = math.exp %262 : vector<2x12xf32>
    %cst_67 = arith.constant 1.000000e+00 : f32
    %264 = vector.broadcast %cst_67 : f32 to vector<2x12xf32>
    %265 = arith.addf %264, %263 : vector<2x12xf32>
    %266 = arith.divf %264, %265 : vector<2x12xf32>
    %267 = vector.extract_strided_slice %254 {offsets = [0, 24], sizes = [2, 12], strides = [1, 1]} : vector<2x48xf32> to vector<2x12xf32>
    %268 = math.tanh %267 : vector<2x12xf32>
    %269 = vector.extract_strided_slice %254 {offsets = [0, 36], sizes = [2, 12], strides = [1, 1]} : vector<2x48xf32> to vector<2x12xf32>
    %270 = arith.negf %269 : vector<2x12xf32>
    %271 = math.exp %270 : vector<2x12xf32>
    %cst_68 = arith.constant 1.000000e+00 : f32
    %272 = vector.broadcast %cst_68 : f32 to vector<2x12xf32>
    %273 = arith.addf %272, %271 : vector<2x12xf32>
    %274 = arith.divf %272, %273 : vector<2x12xf32>
    %275 = arith.mulf %266, %248 : vector<2x12xf32>
    %276 = arith.mulf %260, %268 : vector<2x12xf32>
    %277 = arith.addf %275, %276 : vector<2x12xf32>
    %278 = math.tanh %277 : vector<2x12xf32>
    %279 = arith.mulf %274, %278 : vector<2x12xf32>
    %280 = vector.extract_strided_slice %132 {offsets = [10, 0], sizes = [2, 48], strides = [1, 1]} : vector<16x48xf32> to vector<2x48xf32>
    %281 = arith.truncf %279 : vector<2x12xf32> to vector<2x12xbf16>
    %cst_69 = arith.constant dense<0.000000e+00> : vector<2x48xf32>
    %282 = tpu.matmul %281, %8, %cst_69 {dimension_numbers = #tpu.dot_dimension_numbers<[1], [0], [0], [1], [0, 0, 1, 1], [], []>} : vector<2x12xbf16>, vector<12x48xbf16>, vector<2x48xf32> -> vector<2x48xf32>
    %283 = arith.addf %280, %282 : vector<2x48xf32>
    %284 = vector.extract_strided_slice %283 {offsets = [0, 0], sizes = [2, 12], strides = [1, 1]} : vector<2x48xf32> to vector<2x12xf32>
    %285 = arith.negf %284 : vector<2x12xf32>
    %286 = math.exp %285 : vector<2x12xf32>
    %cst_70 = arith.constant 1.000000e+00 : f32
    %287 = vector.broadcast %cst_70 : f32 to vector<2x12xf32>
    %288 = arith.addf %287, %286 : vector<2x12xf32>
    %289 = arith.divf %287, %288 : vector<2x12xf32>
    %290 = vector.extract_strided_slice %283 {offsets = [0, 12], sizes = [2, 12], strides = [1, 1]} : vector<2x48xf32> to vector<2x12xf32>
    %291 = arith.negf %290 : vector<2x12xf32>
    %292 = math.exp %291 : vector<2x12xf32>
    %cst_71 = arith.constant 1.000000e+00 : f32
    %293 = vector.broadcast %cst_71 : f32 to vector<2x12xf32>
    %294 = arith.addf %293, %292 : vector<2x12xf32>
    %295 = arith.divf %293, %294 : vector<2x12xf32>
    %296 = vector.extract_strided_slice %283 {offsets = [0, 24], sizes = [2, 12], strides = [1, 1]} : vector<2x48xf32> to vector<2x12xf32>
    %297 = math.tanh %296 : vector<2x12xf32>
    %298 = vector.extract_strided_slice %283 {offsets = [0, 36], sizes = [2, 12], strides = [1, 1]} : vector<2x48xf32> to vector<2x12xf32>
    %299 = arith.negf %298 : vector<2x12xf32>
    %300 = math.exp %299 : vector<2x12xf32>
    %cst_72 = arith.constant 1.000000e+00 : f32
    %301 = vector.broadcast %cst_72 : f32 to vector<2x12xf32>
    %302 = arith.addf %301, %300 : vector<2x12xf32>
    %303 = arith.divf %301, %302 : vector<2x12xf32>
    %304 = arith.mulf %295, %277 : vector<2x12xf32>
    %305 = arith.mulf %289, %297 : vector<2x12xf32>
    %306 = arith.addf %304, %305 : vector<2x12xf32>
    %307 = math.tanh %306 : vector<2x12xf32>
    %308 = arith.mulf %303, %307 : vector<2x12xf32>
    %309 = vector.extract_strided_slice %132 {offsets = [12, 0], sizes = [2, 48], strides = [1, 1]} : vector<16x48xf32> to vector<2x48xf32>
    %310 = arith.truncf %308 : vector<2x12xf32> to vector<2x12xbf16>
    %cst_73 = arith.constant dense<0.000000e+00> : vector<2x48xf32>
    %311 = tpu.matmul %310, %8, %cst_73 {dimension_numbers = #tpu.dot_dimension_numbers<[1], [0], [0], [1], [0, 0, 1, 1], [], []>} : vector<2x12xbf16>, vector<12x48xbf16>, vector<2x48xf32> -> vector<2x48xf32>
    %312 = arith.addf %309, %311 : vector<2x48xf32>
    %313 = vector.extract_strided_slice %312 {offsets = [0, 0], sizes = [2, 12], strides = [1, 1]} : vector<2x48xf32> to vector<2x12xf32>
    %314 = arith.negf %313 : vector<2x12xf32>
    %315 = math.exp %314 : vector<2x12xf32>
    %cst_74 = arith.constant 1.000000e+00 : f32
    %316 = vector.broadcast %cst_74 : f32 to vector<2x12xf32>
    %317 = arith.addf %316, %315 : vector<2x12xf32>
    %318 = arith.divf %316, %317 : vector<2x12xf32>
    %319 = vector.extract_strided_slice %312 {offsets = [0, 12], sizes = [2, 12], strides = [1, 1]} : vector<2x48xf32> to vector<2x12xf32>
    %320 = arith.negf %319 : vector<2x12xf32>
    %321 = math.exp %320 : vector<2x12xf32>
    %cst_75 = arith.constant 1.000000e+00 : f32
    %322 = vector.broadcast %cst_75 : f32 to vector<2x12xf32>
    %323 = arith.addf %322, %321 : vector<2x12xf32>
    %324 = arith.divf %322, %323 : vector<2x12xf32>
    %325 = vector.extract_strided_slice %312 {offsets = [0, 24], sizes = [2, 12], strides = [1, 1]} : vector<2x48xf32> to vector<2x12xf32>
    %326 = math.tanh %325 : vector<2x12xf32>
    %327 = vector.extract_strided_slice %312 {offsets = [0, 36], sizes = [2, 12], strides = [1, 1]} : vector<2x48xf32> to vector<2x12xf32>
    %328 = arith.negf %327 : vector<2x12xf32>
    %329 = math.exp %328 : vector<2x12xf32>
    %cst_76 = arith.constant 1.000000e+00 : f32
    %330 = vector.broadcast %cst_76 : f32 to vector<2x12xf32>
    %331 = arith.addf %330, %329 : vector<2x12xf32>
    %332 = arith.divf %330, %331 : vector<2x12xf32>
    %333 = arith.mulf %324, %306 : vector<2x12xf32>
    %334 = arith.mulf %318, %326 : vector<2x12xf32>
    %335 = arith.addf %333, %334 : vector<2x12xf32>
    %336 = math.tanh %335 : vector<2x12xf32>
    %337 = arith.mulf %332, %336 : vector<2x12xf32>
    %338 = vector.extract_strided_slice %132 {offsets = [14, 0], sizes = [2, 48], strides = [1, 1]} : vector<16x48xf32> to vector<2x48xf32>
    %339 = arith.truncf %337 : vector<2x12xf32> to vector<2x12xbf16>
    %cst_77 = arith.constant dense<0.000000e+00> : vector<2x48xf32>
    %340 = tpu.matmul %339, %8, %cst_77 {dimension_numbers = #tpu.dot_dimension_numbers<[1], [0], [0], [1], [0, 0, 1, 1], [], []>} : vector<2x12xbf16>, vector<12x48xbf16>, vector<2x48xf32> -> vector<2x48xf32>
    %341 = arith.addf %338, %340 : vector<2x48xf32>
    %342 = vector.extract_strided_slice %341 {offsets = [0, 0], sizes = [2, 12], strides = [1, 1]} : vector<2x48xf32> to vector<2x12xf32>
    %343 = arith.negf %342 : vector<2x12xf32>
    %344 = math.exp %343 : vector<2x12xf32>
    %cst_78 = arith.constant 1.000000e+00 : f32
    %345 = vector.broadcast %cst_78 : f32 to vector<2x12xf32>
    %346 = arith.addf %345, %344 : vector<2x12xf32>
    %347 = arith.divf %345, %346 : vector<2x12xf32>
    %348 = vector.extract_strided_slice %341 {offsets = [0, 12], sizes = [2, 12], strides = [1, 1]} : vector<2x48xf32> to vector<2x12xf32>
    %349 = arith.negf %348 : vector<2x12xf32>
    %350 = math.exp %349 : vector<2x12xf32>
    %cst_79 = arith.constant 1.000000e+00 : f32
    %351 = vector.broadcast %cst_79 : f32 to vector<2x12xf32>
    %352 = arith.addf %351, %350 : vector<2x12xf32>
    %353 = arith.divf %351, %352 : vector<2x12xf32>
    %354 = vector.extract_strided_slice %341 {offsets = [0, 24], sizes = [2, 12], strides = [1, 1]} : vector<2x48xf32> to vector<2x12xf32>
    %355 = math.tanh %354 : vector<2x12xf32>
    %356 = vector.extract_strided_slice %341 {offsets = [0, 36], sizes = [2, 12], strides = [1, 1]} : vector<2x48xf32> to vector<2x12xf32>
    %357 = arith.negf %356 : vector<2x12xf32>
    %358 = math.exp %357 : vector<2x12xf32>
    %cst_80 = arith.constant 1.000000e+00 : f32
    %359 = vector.broadcast %cst_80 : f32 to vector<2x12xf32>
    %360 = arith.addf %359, %358 : vector<2x12xf32>
    %361 = arith.divf %359, %360 : vector<2x12xf32>
    %362 = arith.mulf %353, %335 : vector<2x12xf32>
    %363 = arith.mulf %347, %355 : vector<2x12xf32>
    %364 = arith.addf %362, %363 : vector<2x12xf32>
    %365 = math.tanh %364 : vector<2x12xf32>
    %366 = arith.mulf %361, %365 : vector<2x12xf32>
    %367 = vector.shape_cast %163 : vector<2x12xf32> to vector<2x1x12xf32>
    %368 = vector.shape_cast %192 : vector<2x12xf32> to vector<2x1x12xf32>
    %369 = vector.shape_cast %221 : vector<2x12xf32> to vector<2x1x12xf32>
    %370 = vector.shape_cast %250 : vector<2x12xf32> to vector<2x1x12xf32>
    %371 = vector.shape_cast %279 : vector<2x12xf32> to vector<2x1x12xf32>
    %372 = vector.shape_cast %308 : vector<2x12xf32> to vector<2x1x12xf32>
    %373 = vector.shape_cast %337 : vector<2x12xf32> to vector<2x1x12xf32>
    %374 = vector.shape_cast %366 : vector<2x12xf32> to vector<2x1x12xf32>
    %375 = tpu.concatenate %367, %368, %369, %370, %371, %372, %373, %374 in 1 : vector<2x1x12xf32>, vector<2x1x12xf32>, vector<2x1x12xf32>, vector<2x1x12xf32>, vector<2x1x12xf32>, vector<2x1x12xf32>, vector<2x1x12xf32>, vector<2x1x12xf32> -> vector<2x8x12xf32>
    %c0_81 = arith.constant 0 : index
    %c0_82 = arith.constant 0 : index
    %c0_83 = arith.constant 0 : index
    %376 = vector.load %arg13[%c0_81, %c0_82, %c0_83] : memref<2x8x12xf32, #tpu.memory_space<vmem>>, vector<2x8x12xf32>
    tpu.vector_store %arg13[%c0_81, %c0_82, %c0_83], %375 {strides = array<i32>} : memref<2x8x12xf32, #tpu.memory_space<vmem>>, vector<2x8x12xf32>,
    %c0_84 = arith.constant 0 : index
    %c0_85 = arith.constant 0 : index
    %c0_86 = arith.constant 0 : index
    %377 = vector.load %arg11[%c0_84, %c0_85, %c0_86] : memref<2x8x1xi32, #tpu.memory_space<vmem>>, vector<2x8x1xi32>
    %378 = tpu.iota {dimensions = array<i32: 2>} : vector<2x8x12xi32>
    %379 = vector.broadcast %377 : vector<2x8x1xi32> to vector<2x8x12xi32>
    %380 = arith.cmpi eq, %378, %379 : vector<2x8x12xi32>
    %381 = arith.extui %380 : vector<2x8x12xi1> to vector<2x8x12xi32>
    %382 = arith.sitofp %381 : vector<2x8x12xi32> to vector<2x8x12xf32>
    %cst_87 = arith.constant dense<0xFF800000> : vector<2x8xf32>
    %383 = vector.multi_reduction <maximumf>, %375, %cst_87 [2] : vector<2x8x12xf32> to vector<2x8xf32>
    %384 = vector.shape_cast %383 : vector<2x8xf32> to vector<2x8x1xf32>
    %385 = vector.broadcast %384 : vector<2x8x1xf32> to vector<2x8x12xf32>
    %386 = arith.subf %375, %385 : vector<2x8x12xf32>
    %387 = math.exp %386 : vector<2x8x12xf32>
    %cst_88 = arith.constant dense<0.000000e+00> : vector<2x8xf32>
    %388 = vector.multi_reduction <add>, %387, %cst_88 [2] : vector<2x8x12xf32> to vector<2x8xf32>
    %389 = vector.shape_cast %388 : vector<2x8xf32> to vector<2x8x1xf32>
    %390 = math.log %389 : vector<2x8x1xf32>
    %391 = arith.addf %384, %390 : vector<2x8x1xf32>
    %392 = arith.mulf %375, %382 : vector<2x8x12xf32>
    %cst_89 = arith.constant dense<0.000000e+00> : vector<2x8xf32>
    %393 = vector.multi_reduction <add>, %392, %cst_89 [2] : vector<2x8x12xf32> to vector<2x8xf32>
    %394 = vector.shape_cast %393 : vector<2x8xf32> to vector<2x8x1xf32>
    %395 = vector.shape_cast %44 : vector<8x1xf32> to vector<1x8x1xf32>
    %396 = vector.shape_cast %96 : vector<8x1xf32> to vector<1x8x1xf32>
    %397 = tpu.concatenate %395, %396 in 0 : vector<1x8x1xf32>, vector<1x8x1xf32> -> vector<2x8x1xf32>
    %398 = arith.subf %391, %394 : vector<2x8x1xf32>
    %399 = arith.mulf %398, %397 : vector<2x8x1xf32>
    %400 = vector.shape_cast %399 : vector<2x8x1xf32> to vector<1x2x8x1xf32>
    %cst_90 = arith.constant dense<0.000000e+00> : vector<1xf32>
    %401 = vector.multi_reduction <add>, %400, %cst_90 [1, 2, 3] : vector<1x2x8x1xf32> to vector<1xf32>
    %402 = vector.shape_cast %401 : vector<1xf32> to vector<1x1x1x1xf32>
    %403 = vector.extract %402[0, 0, 0, 0] : f32 from vector<1x1x1x1xf32>
    %cst_91 = arith.constant 2.000000e+00 : f32
    %404 = arith.divf %403, %cst_91 : f32
    %cst_92 = arith.constant 2.000000e+00 : f32
    %405 = arith.divf %121, %cst_92 : f32
    %cst_93 = arith.constant 5.000000e-01 : f32
    %406 = arith.mulf %cst_93, %405 : f32
    %407 = arith.addf %404, %406 : f32
    %408 = vector.broadcast %407 : f32 to vector<1x1xf32>
    %c0_94 = arith.constant 0 : index
    %c0_95 = arith.constant 0 : index
    %409 = vector.load %arg12[%c0_94, %c0_95] : memref<1x1xf32, #tpu.memory_space<vmem>>, vector<1x1xf32>
    tpu.vector_store %arg12[%c0_94, %c0_95], %408 {strides = array<i32>} : memref<1x1xf32, #tpu.memory_space<vmem>>, vector<1x1xf32>,
    return
  }
  func.func @transform_0(%arg0: i32, %arg1: memref<2xi32, #tpu.memory_space<smem>>) -> (i32, i32, i32) {
    %c0_i32 = arith.constant 0 : i32
    %c0_i32_0 = arith.constant 0 : i32
    %c0_i32_1 = arith.constant 0 : i32
    %c0_i32_2 = arith.constant 0 : i32
    return %c0_i32, %c0_i32_0, %c0_i32_1 : i32, i32, i32
  }
  func.func @transform_1(%arg0: i32, %arg1: memref<2xi32, #tpu.memory_space<smem>>) -> (i32, i32, i32) {
    %c0_i32 = arith.constant 0 : i32
    %c0_i32_0 = arith.constant 0 : i32
    %c0_i32_1 = arith.constant 0 : i32
    %c0_i32_2 = arith.constant 0 : i32
    return %c0_i32, %c0_i32_0, %c0_i32_1 : i32, i32, i32
  }
  func.func @transform_2(%arg0: i32, %arg1: memref<2xi32, #tpu.memory_space<smem>>) -> (i32, i32) {
    %c0_i32 = arith.constant 0 : i32
    %c0_i32_0 = arith.constant 0 : i32
    %c0_i32_1 = arith.constant 0 : i32
    return %c0_i32, %c0_i32_0 : i32, i32
  }
  func.func @transform_3(%arg0: i32, %arg1: memref<2xi32, #tpu.memory_space<smem>>) -> (i32, i32) {
    %c0_i32 = arith.constant 0 : i32
    %c0_i32_0 = arith.constant 0 : i32
    %c0_i32_1 = arith.constant 0 : i32
    return %c0_i32, %c0_i32_0 : i32, i32
  }
  func.func @transform_4(%arg0: i32, %arg1: memref<2xi32, #tpu.memory_space<smem>>) -> (i32, i32) {
    %c0_i32 = arith.constant 0 : i32
    %c0_i32_0 = arith.constant 0 : i32
    %c0_i32_1 = arith.constant 0 : i32
    return %c0_i32, %c0_i32_0 : i32, i32
  }
  func.func @transform_5(%arg0: i32, %arg1: memref<2xi32, #tpu.memory_space<smem>>) -> (i32, i32) {
    %c0_i32 = arith.constant 0 : i32
    %c0_i32_0 = arith.constant 0 : i32
    %c0_i32_1 = arith.constant 0 : i32
    return %c0_i32, %c0_i32_0 : i32, i32
  }
  func.func @transform_6(%arg0: i32, %arg1: memref<2xi32, #tpu.memory_space<smem>>) -> (i32, i32) {
    %c0_i32 = arith.constant 0 : i32
    %c0_i32_0 = arith.constant 0 : i32
    %c0_i32_1 = arith.constant 0 : i32
    return %c0_i32, %c0_i32_0 : i32, i32
  }
  func.func @transform_7(%arg0: i32, %arg1: memref<2xi32, #tpu.memory_space<smem>>) -> (i32, i32) {
    %c0_i32 = arith.constant 0 : i32
    %c0_i32_0 = arith.constant 0 : i32
    %c0_i32_1 = arith.constant 0 : i32
    return %c0_i32, %c0_i32_0 : i32, i32
  }
  func.func @transform_8(%arg0: i32, %arg1: memref<2xi32, #tpu.memory_space<smem>>) -> (i32, i32, i32) {
    %c0_i32 = arith.constant 0 : i32
    %c0_i32_0 = arith.constant 0 : i32
    %c0_i32_1 = arith.constant 0 : i32
    %c0_i32_2 = arith.constant 0 : i32
    return %c0_i32, %c0_i32_0, %c0_i32_1 : i32, i32, i32
  }
  func.func @transform_9(%arg0: i32, %arg1: memref<2xi32, #tpu.memory_space<smem>>) -> (i32, i32, i32) {
    %c0_i32 = arith.constant 0 : i32
    %c0_i32_0 = arith.constant 0 : i32
    %c0_i32_1 = arith.constant 0 : i32
    %c0_i32_2 = arith.constant 0 : i32
    return %c0_i32, %c0_i32_0, %c0_i32_1 : i32, i32, i32
  }
  func.func @transform_10(%arg0: i32, %arg1: memref<2xi32, #tpu.memory_space<smem>>) -> (i32, i32) {
    %c0_i32 = arith.constant 0 : i32
    %c0_i32_0 = arith.constant 0 : i32
    %c0_i32_1 = arith.constant 0 : i32
    return %c0_i32, %c0_i32_0 : i32, i32
  }
  func.func @transform_11(%arg0: i32, %arg1: memref<2xi32, #tpu.memory_space<smem>>) -> (i32, i32, i32) {
    %c0_i32 = arith.constant 0 : i32
    %c0_i32_0 = arith.constant 0 : i32
    %c0_i32_1 = arith.constant 0 : i32
    %c0_i32_2 = arith.constant 0 : i32
    return %c0_i32, %c0_i32_0, %c0_i32_1 : i32, i32, i32
  }
}

</mosaic_0001>

<llo_original>
// kernel: tpu_custom_call.1
$region0: #{tpu_custom_call.1}
  #allocation0 [shape = 'u32[]', space=smem, size = 0x4, offset = 0x4, fixed_abs, tag = 'smem constant byte address 0x4 - core index']
  #allocation1 [shape = 'u32[144,128]{1,0:T(1,128)}', space=vmem, size = 0x12000, scoped, tag = 'internal scratch']
  #allocation2 [shape = 's32[1]{0}', space=sflag, size = 0x4, scoped, tag = 'scoped memory for tpu_custom_call.1']
  #allocation3 [shape = 'u8[512]{0}', space=smem, size = 0x200, scoped, tag = 'prefetched SMEM operand 0']
  %s0 = inlined_call_operand.hbm [shape: s32[2], index: 0, kind: input, shape index: {}]
  %s1 = inlined_call_operand.vmem [shape: f32[2,8,32], index: 1, kind: input, shape index: {}]
  %s2 = inlined_call_operand.hbm [shape: f32[2,4,32], index: 2, kind: input, shape index: {}]
  %s3 = inlined_call_operand.vmem [shape: f32[32,32], index: 3, kind: input, shape index: {}]
  %s4 = inlined_call_operand.hbm [shape: f32[1,32], index: 4, kind: input, shape index: {}]
  %s5 = inlined_call_operand.hbm [shape: f32[32,64], index: 5, kind: input, shape index: {}]
  %s6 = inlined_call_operand.hbm [shape: f32[8,48], index: 6, kind: input, shape index: {}]
  %s7 = inlined_call_operand.vmem [shape: f32[12,48], index: 7, kind: input, shape index: {}]
  %s8 = inlined_call_operand.hbm [shape: f32[1,48], index: 8, kind: input, shape index: {}]
  %s9 = inlined_call_operand.vmem [shape: f32[2,8,4], index: 9, kind: input, shape index: {}]
  %s10 = inlined_call_operand.vmem [shape: s32[2,8,1], index: 10, kind: input, shape index: {}]
  %s11 = inlined_call_operand.hbm [shape: f32[1,1], index: 11, kind: output, shape index: {0}]
  %s12 = inlined_call_operand.hbm [shape: f32[2,8,12], index: 12, kind: output, shape index: {1}]
  %13 = xla_tuple %s11, %s12
  %s14 = sld [smem:[#allocation0]]
  $region78: #{tpu_custom_call.1} parent=0
    _
  %s16 = ssub.s32 1, %s14
  %s17 = scalar_select 0, %s16, %s14
  %19 = dma.hbm_to_smem %s0, 16, [#allocation3], [#allocation2]
  %20 = dma.done [#allocation2], 16
  %21 = sfence
  $region1: #{tpu_custom_call.1} parent=0
    #allocation4 [shape = 'u8[4096]{0}', space=vmem, size = 0x1000, scoped, tag = 'input window, operand 2, single buffered']
    #allocation5 [shape = 's32[1]{0}', space=sflag, size = 0x4, scoped, tag = 'scoped memory for tpu_custom_call.1']
    #allocation6 [shape = 's32[1]{0}', space=sflag, size = 0x4, scoped, tag = 'scoped memory for tpu_custom_call.1']
    #allocation7 [shape = 'u8[512]{0}', space=vmem, size = 0x400, scoped, tag = 'input window, operand 4, single buffered']
    #allocation8 [shape = 's32[1]{0}', space=sflag, size = 0x4, scoped, tag = 'scoped memory for tpu_custom_call.1']
    #allocation9 [shape = 'u8[16384]{0}', space=vmem, size = 0x4000, scoped, tag = 'input window, operand 5, single buffered']
    #allocation10 [shape = 'u8[4096]{0}', space=vmem, size = 0x1000, scoped, tag = 'input window, operand 6, single buffered']
    #allocation11 [shape = 's32[1]{0}', space=sflag, size = 0x4, scoped, tag = 'scoped memory for tpu_custom_call.1']
    #allocation12 [shape = 'u8[512]{0}', space=vmem, size = 0x400, scoped, tag = 'input window, operand 8, single buffered']
    #allocation13 [shape = 'u8[512]{0}', space=vmem, size = 0x400, scoped, tag = 'output window, operand 0, single buffered']
    #allocation14 [shape = 'u8[8192]{0}', space=vmem, size = 0x2000, scoped, tag = 'output window, operand 1, single buffered']
    #allocation15 [shape = 's32[1]{0}', space=sflag, size = 0x4, scoped, tag = 'scoped memory for tpu_custom_call.1']
    %22 = vsyncpa [#allocation5], 0
    %23 = vsyncpa [#allocation8], 0
    %24 = vsyncpa [#allocation11], 0
    %25 = vsyncpa [#allocation6], 0
    %26 = vsyncpa [#allocation15], 0
    // Predicated region
    $region2: #{tpu_custom_call.1} parent=1 // pred_check
      _
    $region3: #{tpu_custom_call.1} parent=1 // pred_check_branch
      %28 = sbr.rel (0) target = $region5
    $region4: #{tpu_custom_call.1} parent=1 // pred_region
      _
    $region5: #{tpu_custom_call.1} parent=1 // pred_fallthru
      _
    // Predicated region
    $region6: #{tpu_custom_call.1} parent=1 // pred_check
      _
    $region7: #{tpu_custom_call.1} parent=1 // pred_check_branch
      %30 = sbr.rel (0) target = $region9
    $region8: #{tpu_custom_call.1} parent=1 // pred_region
      %s32 = ssub.s32 128, 128
      %33 = vsyncadd [#allocation5], %s32
      %s34 = sshll.u32 [#allocation4], 4
      %s35 = int_to_ptr.vmem [resolvable:$true] %s34
      %40 = dma.hbm_to_vmem [thread:$0]  %s2, 128, %s35, [#allocation5], 64, 64, 4
    $region9: #{tpu_custom_call.1} parent=1 // pred_fallthru
      _
    // Predicated region
    $region10: #{tpu_custom_call.1} parent=1 // pred_check
      _
    $region11: #{tpu_custom_call.1} parent=1 // pred_check_branch
      %42 = sbr.rel (0) target = $region13
    $region12: #{tpu_custom_call.1} parent=1 // pred_region
      _
    $region13: #{tpu_custom_call.1} parent=1 // pred_fallthru
      _
    // Predicated region
    $region14: #{tpu_custom_call.1} parent=1 // pred_check
      _
    $region15: #{tpu_custom_call.1} parent=1 // pred_check_branch
      %44 = sbr.rel (0) target = $region17
    $region16: #{tpu_custom_call.1} parent=1 // pred_region
      %s46 = ssub.s32 16, 16
      %47 = vsyncadd [#allocation8], %s46
      %s49 = sshll.u32 [#allocation7], 4
      %s50 = int_to_ptr.vmem [resolvable:$true] %s49
      %52 = dma.hbm_to_vmem [thread:$0]  %s4, 16, %s50, [#allocation8]
    $region17: #{tpu_custom_call.1} parent=1 // pred_fallthru
      _
    // Predicated region
    $region18: #{tpu_custom_call.1} parent=1 // pred_check
      _
    $region19: #{tpu_custom_call.1} parent=1 // pred_check_branch
      %54 = sbr.rel (0) target = $region21
    $region20: #{tpu_custom_call.1} parent=1 // pred_region
      %s56 = ssub.s32 512, 512
      %57 = vsyncadd [#allocation8], %s56
      %s58 = sshll.u32 [#allocation9], 4
      %s59 = int_to_ptr.vmem [resolvable:$true] %s58
      %64 = dma.hbm_to_vmem [thread:$0]  %s5, 512, %s59, [#allocation8], 128, 128, 8
    $region21: #{tpu_custom_call.1} parent=1 // pred_fallthru
      _
    // Predicated region
    $region22: #{tpu_custom_call.1} parent=1 // pred_check
      _
    $region23: #{tpu_custom_call.1} parent=1 // pred_check_branch
      %66 = sbr.rel (0) target = $region25
    $region24: #{tpu_custom_call.1} parent=1 // pred_region
      %s68 = ssub.s32 128, 128
      %69 = vsyncadd [#allocation11], %s68
      %s71 = sshll.u32 [#allocation10], 4
      %s72 = int_to_ptr.vmem [resolvable:$true] %s71
      %74 = dma.hbm_to_vmem [thread:$0]  %s6, 128, %s72, [#allocation11]
    $region25: #{tpu_custom_call.1} parent=1 // pred_fallthru
      _
    // Predicated region
    $region26: #{tpu_custom_call.1} parent=1 // pred_check
      _
    $region27: #{tpu_custom_call.1} parent=1 // pred_check_branch
      %76 = sbr.rel (0) target = $region29
    $region28: #{tpu_custom_call.1} parent=1 // pred_region
      _
    $region29: #{tpu_custom_call.1} parent=1 // pred_fallthru
      _
    // Predicated region
    $region30: #{tpu_custom_call.1} parent=1 // pred_check
      _
    $region31: #{tpu_custom_call.1} parent=1 // pred_check_branch
      %78 = sbr.rel (0) target = $region33
    $region32: #{tpu_custom_call.1} parent=1 // pred_region
      %s80 = ssub.s32 16, 16
      %81 = vsyncadd [#allocation11], %s80
      %s83 = sshll.u32 [#allocation12], 4
      %s84 = int_to_ptr.vmem [resolvable:$true] %s83
      %86 = dma.hbm_to_vmem [thread:$0]  %s8, 16, %s84, [#allocation11]
    $region33: #{tpu_custom_call.1} parent=1 // pred_fallthru
      _
    // Predicated region
    $region34: #{tpu_custom_call.1} parent=1 // pred_check
      _
    $region35: #{tpu_custom_call.1} parent=1 // pred_check_branch
      %88 = sbr.rel (0) target = $region37
    $region36: #{tpu_custom_call.1} parent=1 // pred_region
      _
    $region37: #{tpu_custom_call.1} parent=1 // pred_fallthru
      _
    // Predicated region
    $region38: #{tpu_custom_call.1} parent=1 // pred_check
      _
    $region39: #{tpu_custom_call.1} parent=1 // pred_check_branch
      %90 = sbr.rel (0) target = $region41
    $region40: #{tpu_custom_call.1} parent=1 // pred_region
      _
    $region41: #{tpu_custom_call.1} parent=1 // pred_fallthru
      _
    // Predicated region
    $region42: #{tpu_custom_call.1} parent=1 // pred_check
      _
    $region43: #{tpu_custom_call.1} parent=1 // pred_check_branch
      %92 = sbr.rel (0) target = $region45
    $region44: #{tpu_custom_call.1} parent=1 // pred_region
      %93 = dma.done [#allocation5], 128
    $region45: #{tpu_custom_call.1} parent=1 // pred_fallthru
      _
    // Predicated region
    $region46: #{tpu_custom_call.1} parent=1 // pred_check
      _
    $region47: #{tpu_custom_call.1} parent=1 // pred_check_branch
      %95 = sbr.rel (0) target = $region49
    $region48: #{tpu_custom_call.1} parent=1 // pred_region
      %96 = dma.done [#allocation8], 16
    $region49: #{tpu_custom_call.1} parent=1 // pred_fallthru
      _
    // Predicated region
    $region50: #{tpu_custom_call.1} parent=1 // pred_check
      _
    $region51: #{tpu_custom_call.1} parent=1 // pred_check_branch
      %98 = sbr.rel (0) target = $region53
    $region52: #{tpu_custom_call.1} parent=1 // pred_region
      %99 = dma.done [#allocation8], 512
    $region53: #{tpu_custom_call.1} parent=1 // pred_fallthru
      _
    // Predicated region
    $region54: #{tpu_custom_call.1} parent=1 // pred_check
      _
    $region55: #{tpu_custom_call.1} parent=1 // pred_check_branch
      %101 = sbr.rel (0) target = $region57
    $region56: #{tpu_custom_call.1} parent=1 // pred_region
      %102 = dma.done [#allocation11], 128
    $region57: #{tpu_custom_call.1} parent=1 // pred_fallthru
      _
    // Predicated region
    $region58: #{tpu_custom_call.1} parent=1 // pred_check
      _
    $region59: #{tpu_custom_call.1} parent=1 // pred_check_branch
      %104 = sbr.rel (0) target = $region61
    $region60: #{tpu_custom_call.1} parent=1 // pred_region
      %105 = dma.done [#allocation11], 16
    $region61: #{tpu_custom_call.1} parent=1 // pred_fallthru
      _
    %v107 = vld [vmem:[%s3] sm:$0xff]
    %v108 = vld [vmem:[%s3 + $0x8] sm:$0xff]
    %v109 = vld [vmem:[%s3 + $0x10] sm:$0xff]
    %v110 = vld [vmem:[%s3 + $0x18] sm:$0xff]
    %v111 = vpack.c.bf16 %v108, %v107
    %v112 = vpack.c.bf16 %v110, %v109
    %v113 = vld [vmem:[#allocation7] sm:$0x1]
    %v114 = vld [vmem:[#allocation9] sm:$0xff]
    %v115 = vld [vmem:[#allocation9 + $0x8] sm:$0xff]
    %v116 = vld [vmem:[#allocation9 + $0x10] sm:$0xff]
    %v117 = vld [vmem:[#allocation9 + $0x18] sm:$0xff]
    %v118 = vpack.c.bf16 %v115, %v114
    %v119 = vpack.c.bf16 %v117, %v116
    %v120 = vld [vmem:[#allocation10] sm:$0xff]
    %v121 = vpack.c.bf16 %v120, %v120
    %v122 = vld [vmem:[%s7] sm:$0xff]
    %v123 = vld [vmem:[%s7 + $0x8] sm:$0xf]
    %v124 = vpack.c.bf16 %v123, %v122
    %v125 = vld [vmem:[#allocation12] sm:$0x1]
    %v126 = vld [vmem:[%s1] sm:$0xff]
    %v127 = vld [vmem:[%s1 + $0x8] sm:$0xff]
    %v128 = vpack.c.bf16 %v127, %v126
    %v130 = vlaneseq
    %v131 = vshrl.u32 %v130, 7
    %v132 = vsub.s32 0, %v131
    %v133 = vrot.slane %v113, %v132
    %vm135 = vcmask 261120
    %v137 = vsel %vm135, %v128, 0
    %139 = vmatprep.subr.bf16.mxu0 0
    %140 = vmatpush1.bf16.msra.mxu0 %v111
    %141 = vmatprep.subr.bf16.mxu0 0
    %142 = vmatpush1.bf16.msra.mxu0 %v112
    %143 = vmatprep.subr.bf16.mxu0 0
    %144 = vmatpush1.bf16.msra.mxu0 0
    %145 = vmatprep.subr.bf16.mxu0 0
    %146 = vmatpush1.bf16.msra.mxu0 0
    %147 = vmatprep.subr.bf16.mxu0 0
    %148 = vmatpush1.bf16.msra.mxu0 0
    %149 = vmatprep.subr.bf16.mxu0 0
    %150 = vmatpush1.bf16.msra.mxu0 0
    %151 = vmatprep.subr.bf16.mxu0 0
    %152 = vmatpush1.bf16.msra.mxu0 0
    %153 = vmatprep.subr.bf16.mxu0 0
    %154 = vmatpush1.bf16.msra.mxu0 0
    %155 = vmatprep.subr.bf16.mxu0 0
    %156 = vmatpush1.bf16.msra.mxu0 0
    %157 = vmatprep.subr.bf16.mxu0 0
    %158 = vmatpush1.bf16.msra.mxu0 0
    %159 = vmatprep.subr.bf16.mxu0 0
    %160 = vmatpush1.bf16.msra.mxu0 0
    %161 = vmatprep.subr.bf16.mxu0 0
    %162 = vmatpush1.bf16.msra.mxu0 0
    %163 = vmatprep.subr.bf16.mxu0 0
    %164 = vmatpush1.bf16.msra.mxu0 0
    %165 = vmatprep.subr.bf16.mxu0 0
    %166 = vmatpush1.bf16.msra.mxu0 0
    %167 = vmatprep.subr.bf16.mxu0 0
    %168 = vmatpush1.bf16.msra.mxu0 0
    %169 = vmatprep.subr.bf16.mxu0 0
    %170 = vmatpush1.bf16.msra.mxu0 0
    %171 = vmatprep.mubr.bf16.mxu0 0
    %172 = vmatmul.mubr.bf16.gmra.mrb[0].mxu0 %v137
    %v173 = vpop.f32.mrb[0].mxu0
    %v174 = vadd.f32 %v133, %v173
    %v175 = vpop.f32.mrb[0].mxu0
    %v176 = vpop.f32.mrb[0].mxu0
    %v177 = vadd.f32 %v133, %v176
    %v178 = vpop.f32.mrb[0].mxu0
    %179 = vdwg.mxu0
    %v180 = vpack.c.bf16 %v177, %v174
    %v182 = vsel %vm135, %v180, 0
    %184 = vmatprep.subr.bf16.mxu0 0
    %185 = vmatpush1.bf16.msra.mxu0 %v118
    %186 = vmatprep.subr.bf16.mxu0 0
    %187 = vmatpush1.bf16.msra.mxu0 %v119
    %188 = vmatprep.subr.bf16.mxu0 0
    %189 = vmatpush1.bf16.msra.mxu0 0
    %190 = vmatprep.subr.bf16.mxu0 0
    %191 = vmatpush1.bf16.msra.mxu0 0
    %192 = vmatprep.subr.bf16.mxu0 0
    %193 = vmatpush1.bf16.msra.mxu0 0
    %194 = vmatprep.subr.bf16.mxu0 0
    %195 = vmatpush1.bf16.msra.mxu0 0
    %196 = vmatprep.subr.bf16.mxu0 0
    %197 = vmatpush1.bf16.msra.mxu0 0
    %198 = vmatprep.subr.bf16.mxu0 0
    %199 = vmatpush1.bf16.msra.mxu0 0
    %200 = vmatprep.subr.bf16.mxu0 0
    %201 = vmatpush1.bf16.msra.mxu0 0
    %202 = vmatprep.subr.bf16.mxu0 0
    %203 = vmatpush1.bf16.msra.mxu0 0
    %204 = vmatprep.subr.bf16.mxu0 0
    %205 = vmatpush1.bf16.msra.mxu0 0
    %206 = vmatprep.subr.bf16.mxu0 0
    %207 = vmatpush1.bf16.msra.mxu0 0
    %208 = vmatprep.subr.bf16.mxu0 0
    %209 = vmatpush1.bf16.msra.mxu0 0
    %210 = vmatprep.subr.bf16.mxu0 0
    %211 = vmatpush1.bf16.msra.mxu0 0
    %212 = vmatprep.subr.bf16.mxu0 0
    %213 = vmatpush1.bf16.msra.mxu0 0
    %214 = vmatprep.subr.bf16.mxu0 0
    %215 = vmatpush1.bf16.msra.mxu0 0
    %216 = vmatprep.mubr.bf16.mxu0 0
    %217 = vmatmul.mubr.bf16.gmra.mrb[0].mxu0 %v182
    %v218 = vpop.f32.mrb[0].mxu0
    %v219 = vadd.f32 0.0, %v218
    %v220 = vpop.f32.mrb[0].mxu0
    %v221 = vpop.f32.mrb[0].mxu0
    %v222 = vadd.f32 0.0, %v221
    %v223 = vpop.f32.mrb[0].mxu0
    %224 = vdwg.mxu0
    %v225 = vtanh.pop %v219
    %v226 = vtanh.pop %v222
    %228 = vrot.lane.b32.xlu0 %v225, 96
    %v229 = vpop.permute.xlu0 %228
    %v231 = vpack.c.bf16 %v229, %v219
    %v232 = vld [vmem:[#allocation4] sm:$0xf]
    %v233 = vpack.c.bf16 %v232, %v232
    %v235 = vsel %vm135, %v231, 0
    %v238 = vsel %vm135, %v233, 0
    %240 = vmatprep.subr.bf16.mxu0 0
    %241 = vmatpush1.bf16.xpose.msra.mxu0 %v238
    %242 = vmatprep.subr.bf16.mxu0 0
    %243 = vmatpush1.bf16.xpose.msra.mxu0 0
    %244 = vmatprep.subr.bf16.mxu0 0
    %245 = vmatpush1.bf16.xpose.msra.mxu0 0
    %246 = vmatprep.subr.bf16.mxu0 0
    %247 = vmatpush1.bf16.xpose.msra.mxu0 0
    %248 = vmatprep.subr.bf16.mxu0 0
    %249 = vmatpush1.bf16.xpose.msra.mxu0 0
    %250 = vmatprep.subr.bf16.mxu0 0
    %251 = vmatpush1.bf16.xpose.msra.mxu0 0
    %252 = vmatprep.subr.bf16.mxu0 0
    %253 = vmatpush1.bf16.xpose.msra.mxu0 0
    %254 = vmatprep.subr.bf16.mxu0 0
    %255 = vmatpush1.bf16.xpose.msra.mxu0 0
    %256 = vmatprep.subr.bf16.mxu0 0
    %257 = vmatpush1.bf16.xpose.msra.mxu0 0
    %258 = vmatprep.subr.bf16.mxu0 0
    %259 = vmatpush1.bf16.xpose.msra.mxu0 0
    %260 = vmatprep.subr.bf16.mxu0 0
    %261 = vmatpush1.bf16.xpose.msra.mxu0 0
    %262 = vmatprep.subr.bf16.mxu0 0
    %263 = vmatpush1.bf16.xpose.msra.mxu0 0
    %264 = vmatprep.subr.bf16.mxu0 0
    %265 = vmatpush1.bf16.xpose.msra.mxu0 0
    %266 = vmatprep.subr.bf16.mxu0 0
    %267 = vmatpush1.bf16.xpose.msra.mxu0 0
    %268 = vmatprep.subr.bf16.mxu0 0
    %269 = vmatpush1.bf16.xpose.msra.mxu0 0
    %270 = vmatprep.subr.bf16.mxu0 0
    %271 = vmatpush1.bf16.xpose.msra.mxu0 0
    %272 = vmatprep.mubr.bf16.mxu0 0
    %273 = vmatmul.mubr.bf16.gmra.mrb[0].mxu0 %v235
    %v274 = vpop.f32.mrb[0].mxu0
    %v275 = vadd.f32 0.0, %v274
    %v276 = vpop.f32.mrb[0].mxu0
    %v277 = vpop.f32.mrb[0].mxu0
    %v278 = vadd.f32 0.0, %v277
    %v279 = vpop.f32.mrb[0].mxu0
    %280 = vdwg.mxu0
    %v281 = vxor.u32 %v275, 2147483648
    %v282 = vxor.u32 %v278, 2147483648
    %v283 = vmul.f32 %v281, 1.442695
    %v284 = vpow.pop %v283
    %v285 = vmul.f32 %v282, 1.442695
    %v286 = vpow.pop %v285
    %v287 = vadd.f32 %v284, 1.0
    %v288 = vadd.f32 %v286, 1.0
    %v289 = vrcp.pop %v287
    %v290 = vmul.f32 1.0, %v289
    %v291 = vrcp.pop %v288
    %v292 = vmul.f32 1.0, %v291
    %s293 = sld [smem:[#allocation3]]
    %p294 = scmp.gt.s32.totalorder %s293, 1
    %s295 = scalar_select %p294, %s293, 1
    %v296 = vlaneseq
    %v297 = vshrl.u32 %v296, 7
    %v298 = vstv %s295
    %vm299 = vcmp.lt.s32.totalorder %v297, %v298
    %v300 = vsel %vm299, 1, 0
    %v301 = vcvt.s32.f32 %v300
    %s302 = scvt.s32.f32 %s295
    %v303 = vstv %s302
    %v304 = vrcp.pop %v303
    %s305 = vtos %v304
    %v306 = vstv %s305
    %v307 = vmul.f32 %v301, %v306
    %v308 = vld [vmem:[%s9] sm:$0xff]
    %v309 = vmax.f32 %v275, 0.0
    %v310 = vmax.f32 %v278, 0.0
    %v311 = vmul.f32 %v275, %v308
    %v312 = vmul.f32 %v278, %v308
    %v313 = vsub.f32 %v309, %v311
    %v314 = vsub.f32 %v310, %v312
    %v315 = vand.u32 2147483647, %v275
    %v316 = vand.u32 2147483647, %v278
    %v317 = vsub.f32 0.0, %v315
    %v318 = vsub.f32 0.0, %v316
    %v319 = vmul.f32 %v317, 1.442695
    %v320 = vpow.pop %v319
    %v321 = vmul.f32 %v318, 1.442695
    %v322 = vpow.pop %v321
    %v323 = vadd.f32 %v320, 1.0
    %v324 = vadd.f32 %v322, 1.0
    %v325 = vlog2.pop %v323
    %v326 = vmul.f32 %v325, 0.6931472
    %v327 = vlog2.pop %v324
    %v328 = vmul.f32 %v327, 0.6931472
    %v329 = vadd.f32 %v313, %v326
    %v330 = vadd.f32 %v314, %v328
    %332 = vset.pattern.permute.xlu0 0
    %333 = vperm.xlu0 %332, %v301
    %v334 = vpop.permute.xlu0 %333
    %v336 = vmul.f32 %v329, %v334
    %v337 = vmul.f32 %v330, %v334
    %vm338 = vcmask 31744
    %v339 = vsel %vm338, %v336, 0.0
    %v340 = vsel %vm338, %v337, 0.0
    %v341 = vadd.f32 %v339, %v340
    %342 = vadd.xlane.f32.xlu0 %v341
    %v343 = vpop.xlane.xlu0 %342
    %v344 = vrot.slane %v343, 4
    %v345 = vadd.f32 %v343, %v344
    %v346 = vrot.slane %v345, 2
    %v347 = vadd.f32 %v345, %v346
    %v348 = vrot.slane %v347, 1
    %v349 = vadd.f32 %v347, %v348
    %s350 = vtos %v349
    %s351 = smul.f32 %s350, %s305
    %v352 = vrcp.pop 4.0
    %s353 = vtos %v352
    %s354 = smul.f32 %s351, %s353
    %s355 = sadd.f32 %s354, 0.0
    %357 = vrot.lane.b32.xlu0 %v292, 4
    %v358 = vpop.permute.xlu0 %357
    %v360 = vsel %vm338, %v290, %v358
    %362 = vrot.lane.b32.xlu0 %v226, 96
    %v363 = vpop.permute.xlu0 %362
    %v365 = vpack.c.bf16 %v363, %v222
    %s366 = scalar_lea.vmem [#allocation4], 4
    %v367 = vld [vmem:[%s366] sm:$0xf]
    %v368 = vpack.c.bf16 %v367, %v367
    %v370 = vsel %vm135, %v365, 0
    %v373 = vsel %vm135, %v368, 0
    %375 = vmatprep.subr.bf16.mxu0 0
    %376 = vmatpush1.bf16.xpose.msra.mxu0 %v373
    %377 = vmatprep.subr.bf16.mxu0 0
    %378 = vmatpush1.bf16.xpose.msra.mxu0 0
    %379 = vmatprep.subr.bf16.mxu0 0
    %380 = vmatpush1.bf16.xpose.msra.mxu0 0
    %381 = vmatprep.subr.bf16.mxu0 0
    %382 = vmatpush1.bf16.xpose.msra.mxu0 0
    %383 = vmatprep.subr.bf16.mxu0 0
    %384 = vmatpush1.bf16.xpose.msra.mxu0 0
    %385 = vmatprep.subr.bf16.mxu0 0
    %386 = vmatpush1.bf16.xpose.msra.mxu0 0
    %387 = vmatprep.subr.bf16.mxu0 0
    %388 = vmatpush1.bf16.xpose.msra.mxu0 0
    %389 = vmatprep.subr.bf16.mxu0 0
    %390 = vmatpush1.bf16.xpose.msra.mxu0 0
    %391 = vmatprep.subr.bf16.mxu0 0
    %392 = vmatpush1.bf16.xpose.msra.mxu0 0
    %393 = vmatprep.subr.bf16.mxu0 0
    %394 = vmatpush1.bf16.xpose.msra.mxu0 0
    %395 = vmatprep.subr.bf16.mxu0 0
    %396 = vmatpush1.bf16.xpose.msra.mxu0 0
    %397 = vmatprep.subr.bf16.mxu0 0
    %398 = vmatpush1.bf16.xpose.msra.mxu0 0
    %399 = vmatprep.subr.bf16.mxu0 0
    %400 = vmatpush1.bf16.xpose.msra.mxu0 0
    %401 = vmatprep.subr.bf16.mxu0 0
    %402 = vmatpush1.bf16.xpose.msra.mxu0 0
    %403 = vmatprep.subr.bf16.mxu0 0
    %404 = vmatpush1.bf16.xpose.msra.mxu0 0
    %405 = vmatprep.subr.bf16.mxu0 0
    %406 = vmatpush1.bf16.xpose.msra.mxu0 0
    %407 = vmatprep.mubr.bf16.mxu0 0
    %408 = vmatmul.mubr.bf16.gmra.mrb[0].mxu0 %v370
    %v409 = vpop.f32.mrb[0].mxu0
    %v410 = vadd.f32 0.0, %v409
    %v411 = vpop.f32.mrb[0].mxu0
    %v412 = vpop.f32.mrb[0].mxu0
    %v413 = vadd.f32 0.0, %v412
    %v414 = vpop.f32.mrb[0].mxu0
    %415 = vdwg.mxu0
    %v416 = vxor.u32 %v410, 2147483648
    %v417 = vxor.u32 %v413, 2147483648
    %v418 = vmul.f32 %v416, 1.442695
    %v419 = vpow.pop %v418
    %v420 = vmul.f32 %v417, 1.442695
    %v421 = vpow.pop %v420
    %v422 = vadd.f32 %v419, 1.0
    %v423 = vadd.f32 %v421, 1.0
    %v424 = vrcp.pop %v422
    %v425 = vmul.f32 1.0, %v424
    %v426 = vrcp.pop %v423
    %v427 = vmul.f32 1.0, %v426
    %s428 = sld [smem:[#allocation3 + $0x1]]
    %p429 = scmp.gt.s32.totalorder %s428, 1
    %s430 = scalar_select %p429, %s428, 1
    %v431 = vstv %s430
    %vm432 = vcmp.lt.s32.totalorder %v297, %v431
    %v433 = vsel %vm432, 1, 0
    %v434 = vcvt.s32.f32 %v433
    %s435 = scvt.s32.f32 %s430
    %v436 = vstv %s435
    %v437 = vrcp.pop %v436
    %s438 = vtos %v437
    %v439 = vstv %s438
    %v440 = vmul.f32 %v434, %v439
    %s441 = scalar_lea.vmem %s9, 8
    %v442 = vld [vmem:[%s441] sm:$0xff]
    %v443 = vmax.f32 %v410, 0.0
    %v444 = vmax.f32 %v413, 0.0
    %v445 = vmul.f32 %v410, %v442
    %v446 = vmul.f32 %v413, %v442
    %v447 = vsub.f32 %v443, %v445
    %v448 = vsub.f32 %v444, %v446
    %v449 = vand.u32 2147483647, %v410
    %v450 = vand.u32 2147483647, %v413
    %v451 = vsub.f32 0.0, %v449
    %v452 = vsub.f32 0.0, %v450
    %v453 = vmul.f32 %v451, 1.442695
    %v454 = vpow.pop %v453
    %v455 = vmul.f32 %v452, 1.442695
    %v456 = vpow.pop %v455
    %v457 = vadd.f32 %v454, 1.0
    %v458 = vadd.f32 %v456, 1.0
    %v459 = vlog2.pop %v457
    %v460 = vmul.f32 %v459, 0.6931472
    %v461 = vlog2.pop %v458
    %v462 = vmul.f32 %v461, 0.6931472
    %v463 = vadd.f32 %v447, %v460
    %v464 = vadd.f32 %v448, %v462
    %466 = vset.pattern.permute.xlu0 0
    %467 = vperm.xlu0 %466, %v434
    %v468 = vpop.permute.xlu0 %467
    %v470 = vmul.f32 %v463, %v468
    %v471 = vmul.f32 %v464, %v468
    %v472 = vsel %vm338, %v470, 0.0
    %v473 = vsel %vm338, %v471, 0.0
    %v474 = vadd.f32 %v472, %v473
    %475 = vadd.xlane.f32.xlu0 %v474
    %v476 = vpop.xlane.xlu0 %475
    %v477 = vrot.slane %v476, 4
    %v478 = vadd.f32 %v476, %v477
    %v479 = vrot.slane %v478, 2
    %v480 = vadd.f32 %v478, %v479
    %v481 = vrot.slane %v480, 1
    %v482 = vadd.f32 %v480, %v481
    %s483 = vtos %v482
    %s484 = smul.f32 %s483, %s438
    %v485 = vrcp.pop 4.0
    %s486 = vtos %v485
    %s487 = smul.f32 %s484, %s486
    %s488 = sadd.f32 %s355, %s487
    %490 = vrot.lane.b32.xlu0 %v427, 4
    %v491 = vpop.permute.xlu0 %490
    %v493 = vsel %vm338, %v425, %v491
    %v495 = vcombine.high %v360, %v360
    %v497 = vunpack.c.l.s4 1966171168
    %v498 = vunpack.c.0.s8 %v497
    %v499 = vlaneseq
    %v500 = vshrl.u32 %v499, 7
    %v501 = vsub.s32 %v498, %v500
    %v502 = vrot.slane %v360, %v501
    %v504 = vunpack.c.l.s4 1966171168
    %v505 = vunpack.c.0.s8 %v504
    %v506 = vlaneseq
    %v507 = vshrl.u32 %v506, 7
    %v508 = vsub.s32 %v505, %v507
    %v509 = vrot.slane %v495, %v508
    %v510 = vcombine.high %v502, %v502
    %v511 = vcombine.high %v509, %v509
    %v513 = vunpack.c.l.s4 1966171168
    %v514 = vunpack.c.0.s8 %v513
    %v515 = vlaneseq
    %v516 = vshrl.u32 %v515, 7
    %v517 = vsub.s32 %v514, %v516
    %v518 = vrot.slane %v502, %v517
    %v520 = vunpack.c.l.s4 1966171168
    %v521 = vunpack.c.0.s8 %v520
    %v522 = vlaneseq
    %v523 = vshrl.u32 %v522, 7
    %v524 = vsub.s32 %v521, %v523
    %v525 = vrot.slane %v509, %v524
    %v527 = vunpack.c.l.s4 1966171168
    %v528 = vunpack.c.0.s8 %v527
    %v529 = vlaneseq
    %v530 = vshrl.u32 %v529, 7
    %v531 = vsub.s32 %v528, %v530
    %v532 = vrot.slane %v510, %v531
    %v534 = vunpack.c.l.s4 1966171168
    %v535 = vunpack.c.0.s8 %v534
    %v536 = vlaneseq
    %v537 = vshrl.u32 %v536, 7
    %v538 = vsub.s32 %v535, %v537
    %v539 = vrot.slane %v511, %v538
    %v540 = vcombine.high %v518, %v518
    %v541 = vcombine.high %v525, %v525
    %v542 = vcombine.high %v532, %v532
    %v543 = vcombine.high %v539, %v539
    %v553 = vcombine.high %v493, %v493
    %v555 = vunpack.c.l.s4 1966171168
    %v556 = vunpack.c.0.s8 %v555
    %v557 = vlaneseq
    %v558 = vshrl.u32 %v557, 7
    %v559 = vsub.s32 %v556, %v558
    %v560 = vrot.slane %v493, %v559
    %v562 = vunpack.c.l.s4 1966171168
    %v563 = vunpack.c.0.s8 %v562
    %v564 = vlaneseq
    %v565 = vshrl.u32 %v564, 7
    %v566 = vsub.s32 %v563, %v565
    %v567 = vrot.slane %v553, %v566
    %v568 = vcombine.high %v560, %v560
    %v569 = vcombine.high %v567, %v567
    %v571 = vunpack.c.l.s4 1966171168
    %v572 = vunpack.c.0.s8 %v571
    %v573 = vlaneseq
    %v574 = vshrl.u32 %v573, 7
    %v575 = vsub.s32 %v572, %v574
    %v576 = vrot.slane %v560, %v575
    %v578 = vunpack.c.l.s4 1966171168
    %v579 = vunpack.c.0.s8 %v578
    %v580 = vlaneseq
    %v581 = vshrl.u32 %v580, 7
    %v582 = vsub.s32 %v579, %v581
    %v583 = vrot.slane %v567, %v582
    %v585 = vunpack.c.l.s4 1966171168
    %v586 = vunpack.c.0.s8 %v585
    %v587 = vlaneseq
    %v588 = vshrl.u32 %v587, 7
    %v589 = vsub.s32 %v586, %v588
    %v590 = vrot.slane %v568, %v589
    %v592 = vunpack.c.l.s4 1966171168
    %v593 = vunpack.c.0.s8 %v592
    %v594 = vlaneseq
    %v595 = vshrl.u32 %v594, 7
    %v596 = vsub.s32 %v593, %v595
    %v597 = vrot.slane %v569, %v596
    %v598 = vcombine.high %v576, %v576
    %v599 = vcombine.high %v583, %v583
    %v600 = vcombine.high %v590, %v590
    %v601 = vcombine.high %v597, %v597
    %v602 = vlaneseq
    %v603 = vshrl.u32 %v602, 7
    %v604 = vsub.s32 0, %v603
    %v605 = vrot.slane %v576, %v604
    %v606 = vlaneseq
    %v607 = vshrl.u32 %v606, 7
    %v608 = vsub.s32 0, %v607
    %v609 = vrot.slane %v590, %v608
    %v610 = vlaneseq
    %v611 = vshrl.u32 %v610, 7
    %v612 = vsub.s32 0, %v611
    %v613 = vrot.slane %v598, %v612
    %v614 = vlaneseq
    %v615 = vshrl.u32 %v614, 7
    %v616 = vsub.s32 0, %v615
    %v617 = vrot.slane %v600, %v616
    %v618 = vlaneseq
    %v619 = vshrl.u32 %v618, 7
    %v620 = vsub.s32 0, %v619
    %v621 = vrot.slane %v583, %v620
    %v622 = vlaneseq
    %v623 = vshrl.u32 %v622, 7
    %v624 = vsub.s32 0, %v623
    %v625 = vrot.slane %v597, %v624
    %v626 = vlaneseq
    %v627 = vshrl.u32 %v626, 7
    %v628 = vsub.s32 0, %v627
    %v629 = vrot.slane %v599, %v628
    %v630 = vlaneseq
    %v631 = vshrl.u32 %v630, 7
    %v632 = vsub.s32 0, %v631
    %v633 = vrot.slane %v601, %v632
    %vm642 = vcmask 1040384
    %v643 = vsel %vm642, %v518, %v605
    %v644 = vsel %vm642, %v532, %v609
    %v645 = vsel %vm642, %v540, %v613
    %v646 = vsel %vm642, %v542, %v617
    %v647 = vsel %vm642, %v525, %v621
    %v648 = vsel %vm642, %v539, %v625
    %v649 = vsel %vm642, %v541, %v629
    %v650 = vsel %vm642, %v543, %v633
    %v659 = vcombine.low %v643, %v644
    %v660 = vcombine.low %v645, %v646
    %v662 = vunpack.c.l.s4 1983009808
    %v663 = vunpack.c.0.s8 %v662
    %v664 = vlaneseq
    %v665 = vshrl.u32 %v664, 7
    %v666 = vsub.s32 %v663, %v665
    %v667 = vrot.slane %v659, %v666
    %v669 = vunpack.c.l.s4 1983009808
    %v670 = vunpack.c.0.s8 %v669
    %v671 = vlaneseq
    %v672 = vshrl.u32 %v671, 7
    %v673 = vsub.s32 %v670, %v672
    %v674 = vrot.slane %v660, %v673
    %v675 = vcombine.low %v667, %v674
    %v676 = vcombine.low %v647, %v648
    %v677 = vcombine.low %v649, %v650
    %v679 = vunpack.c.l.s4 1983009808
    %v680 = vunpack.c.0.s8 %v679
    %v681 = vlaneseq
    %v682 = vshrl.u32 %v681, 7
    %v683 = vsub.s32 %v680, %v682
    %v684 = vrot.slane %v676, %v683
    %v686 = vunpack.c.l.s4 1983009808
    %v687 = vunpack.c.0.s8 %v686
    %v688 = vlaneseq
    %v689 = vshrl.u32 %v688, 7
    %v690 = vsub.s32 %v687, %v689
    %v691 = vrot.slane %v677, %v690
    %v692 = vcombine.low %v684, %v691
    %v695 = vpack.c.bf16 %v692, %v675
    %v697 = vlaneseq
    %v698 = vshrl.u32 %v697, 7
    %v699 = vsub.s32 0, %v698
    %v700 = vrot.slane %v125, %v699
    %vm702 = vcmask 64512
    %v704 = vsel %vm702, %v695, 0
    %vm706 = vcmask 1043456
    %v708 = vsel %vm706, %v121, 0
    %710 = vmatprep.subr.bf16.mxu0 0
    %711 = vmatpush1.bf16.msra.mxu0 %v708
    %712 = vmatprep.subr.bf16.mxu0 0
    %713 = vmatpush1.bf16.msra.mxu0 0
    %714 = vmatprep.subr.bf16.mxu0 0
    %715 = vmatpush1.bf16.msra.mxu0 0
    %716 = vmatprep.subr.bf16.mxu0 0
    %717 = vmatpush1.bf16.msra.mxu0 0
    %718 = vmatprep.subr.bf16.mxu0 0
    %719 = vmatpush1.bf16.msra.mxu0 0
    %720 = vmatprep.subr.bf16.mxu0 0
    %721 = vmatpush1.bf16.msra.mxu0 0
    %722 = vmatprep.subr.bf16.mxu0 0
    %723 = vmatpush1.bf16.msra.mxu0 0
    %724 = vmatprep.subr.bf16.mxu0 0
    %725 = vmatpush1.bf16.msra.mxu0 0
    %726 = vmatprep.subr.bf16.mxu0 0
    %727 = vmatpush1.bf16.msra.mxu0 0
    %728 = vmatprep.subr.bf16.mxu0 0
    %729 = vmatpush1.bf16.msra.mxu0 0
    %730 = vmatprep.subr.bf16.mxu0 0
    %731 = vmatpush1.bf16.msra.mxu0 0
    %732 = vmatprep.subr.bf16.mxu0 0
    %733 = vmatpush1.bf16.msra.mxu0 0
    %734 = vmatprep.subr.bf16.mxu0 0
    %735 = vmatpush1.bf16.msra.mxu0 0
    %736 = vmatprep.subr.bf16.mxu0 0
    %737 = vmatpush1.bf16.msra.mxu0 0
    %738 = vmatprep.subr.bf16.mxu0 0
    %739 = vmatpush1.bf16.msra.mxu0 0
    %740 = vmatprep.subr.bf16.mxu0 0
    %741 = vmatpush1.bf16.msra.mxu0 0
    %742 = vmatprep.mubr.bf16.mxu0 0
    %743 = vmatmul.mubr.bf16.gmra.mrb[0].mxu0 %v704
    %v744 = vpop.f32.mrb[0].mxu0
    %v745 = vadd.f32 %v700, %v744
    %v746 = vpop.f32.mrb[0].mxu0
    %v747 = vpop.f32.mrb[0].mxu0
    %v748 = vadd.f32 %v700, %v747
    %v749 = vpop.f32.mrb[0].mxu0
    %750 = vdwg.mxu0
    %vm751 = vcmask 97280
    %v753 = vsel %vm751, 0, 0
    %vm755 = vcmask 1045504
    %v757 = vsel %vm755, %v124, 0
    %759 = vmatprep.subr.bf16.mxu0 0
    %760 = vmatpush1.bf16.msra.mxu0 %v757
    %761 = vmatprep.subr.bf16.mxu0 0
    %762 = vmatpush1.bf16.msra.mxu0 0
    %763 = vmatprep.subr.bf16.mxu0 0
    %764 = vmatpush1.bf16.msra.mxu0 0
    %765 = vmatprep.subr.bf16.mxu0 0
    %766 = vmatpush1.bf16.msra.mxu0 0
    %767 = vmatprep.subr.bf16.mxu0 0
    %768 = vmatpush1.bf16.msra.mxu0 0
    %769 = vmatprep.subr.bf16.mxu0 0
    %770 = vmatpush1.bf16.msra.mxu0 0
    %771 = vmatprep.subr.bf16.mxu0 0
    %772 = vmatpush1.bf16.msra.mxu0 0
    %773 = vmatprep.subr.bf16.mxu0 0
    %774 = vmatpush1.bf16.msra.mxu0 0
    %775 = vmatprep.subr.bf16.mxu0 0
    %776 = vmatpush1.bf16.msra.mxu0 0
    %777 = vmatprep.subr.bf16.mxu0 0
    %778 = vmatpush1.bf16.msra.mxu0 0
    %779 = vmatprep.subr.bf16.mxu0 0
    %780 = vmatpush1.bf16.msra.mxu0 0
    %781 = vmatprep.subr.bf16.mxu0 0
    %782 = vmatpush1.bf16.msra.mxu0 0
    %783 = vmatprep.subr.bf16.mxu0 0
    %784 = vmatpush1.bf16.msra.mxu0 0
    %785 = vmatprep.subr.bf16.mxu0 0
    %786 = vmatpush1.bf16.msra.mxu0 0
    %787 = vmatprep.subr.bf16.mxu0 0
    %788 = vmatpush1.bf16.msra.mxu0 0
    %789 = vmatprep.subr.bf16.mxu0 0
    %790 = vmatpush1.bf16.msra.mxu0 0
    %791 = vmatprep.mubr.bf16.mxu0 0
    %792 = vmatmul.mubr.bf16.gmra.mrb[0].mxu0 %v753
    %v793 = vpop.f32.mrb[0].mxu0
    %v794 = vadd.f32 0.0, %v793
    %v795 = vpop.f32.mrb[0].mxu0
    %v796 = vpop.f32.mrb[0].mxu0
    %v797 = vpop.f32.mrb[0].mxu0
    %798 = vdwg.mxu0
    %v799 = vadd.f32 %v745, %v794
    %v800 = vxor.u32 %v799, 2147483648
    %v801 = vmul.f32 %v800, 1.442695
    %v802 = vpow.pop %v801
    %v803 = vadd.f32 %v802, 1.0
    %v804 = vrcp.pop %v803
    %v805 = vmul.f32 1.0, %v804
    %v806 = vtanh.pop %v799
    %v807 = vmul.f32 %v805, 0.0
    %809 = vrot.lane.b32.xlu0 %v806, 104
    %v810 = vpop.permute.xlu0 %809
    %v812 = vmul.f32 %v805, %v810
    %814 = vrot.lane.b32.xlu0 %v812, 12
    %v815 = vpop.permute.xlu0 %814
    %v817 = vadd.f32 %v807, %v815
    %v818 = vtanh.pop %v817
    %820 = vrot.lane.b32.xlu0 %v818, 24
    %v821 = vpop.permute.xlu0 %820
    %v823 = vmul.f32 %v805, %v821
    %v824 = vpack.c.bf16 %v823, %v823
    %826 = vrot.lane.b32.xlu0 %v824, 92
    %v827 = vpop.permute.xlu0 %826
    %v829 = vsel %vm751, %v827, 0
    %831 = vmatprep.subr.bf16.mxu0 0
    %832 = vmatpush1.bf16.msra.mxu0 %v757
    %833 = vmatprep.subr.bf16.mxu0 0
    %834 = vmatpush1.bf16.msra.mxu0 0
    %835 = vmatprep.subr.bf16.mxu0 0
    %836 = vmatpush1.bf16.msra.mxu0 0
    %837 = vmatprep.subr.bf16.mxu0 0
    %838 = vmatpush1.bf16.msra.mxu0 0
    %839 = vmatprep.subr.bf16.mxu0 0
    %840 = vmatpush1.bf16.msra.mxu0 0
    %841 = vmatprep.subr.bf16.mxu0 0
    %842 = vmatpush1.bf16.msra.mxu0 0
    %843 = vmatprep.subr.bf16.mxu0 0
    %844 = vmatpush1.bf16.msra.mxu0 0
    %845 = vmatprep.subr.bf16.mxu0 0
    %846 = vmatpush1.bf16.msra.mxu0 0
    %847 = vmatprep.subr.bf16.mxu0 0
    %848 = vmatpush1.bf16.msra.mxu0 0
    %849 = vmatprep.subr.bf16.mxu0 0
    %850 = vmatpush1.bf16.msra.mxu0 0
    %851 = vmatprep.subr.bf16.mxu0 0
    %852 = vmatpush1.bf16.msra.mxu0 0
    %853 = vmatprep.subr.bf16.mxu0 0
    %854 = vmatpush1.bf16.msra.mxu0 0
    %855 = vmatprep.subr.bf16.mxu0 0
    %856 = vmatpush1.bf16.msra.mxu0 0
    %857 = vmatprep.subr.bf16.mxu0 0
    %858 = vmatpush1.bf16.msra.mxu0 0
    %859 = vmatprep.subr.bf16.mxu0 0
    %860 = vmatpush1.bf16.msra.mxu0 0
    %861 = vmatprep.subr.bf16.mxu0 0
    %862 = vmatpush1.bf16.msra.mxu0 0
    %863 = vmatprep.mubr.bf16.mxu0 0
    %864 = vmatmul.mubr.bf16.gmra.mrb[0].mxu0 %v829
    %v865 = vpop.f32.mrb[0].mxu0
    %v866 = vadd.f32 0.0, %v865
    %v867 = vpop.f32.mrb[0].mxu0
    %v868 = vpop.f32.mrb[0].mxu0
    %v869 = vpop.f32.mrb[0].mxu0
    %870 = vdwg.mxu0
    %v872 = vrot.slane %v866, 6
    %v874 = vadd.f32 %v745, %v872
    %v875 = vxor.u32 %v874, 2147483648
    %v876 = vmul.f32 %v875, 1.442695
    %v877 = vpow.pop %v876
    %v878 = vadd.f32 %v877, 1.0
    %v879 = vrcp.pop %v878
    %v880 = vmul.f32 1.0, %v879
    %v881 = vtanh.pop %v874
    %v883 = vrot.slane %v817, 6
    %v885 = vmul.f32 %v880, %v883
    %887 = vrot.lane.b32.xlu0 %v881, 104
    %v888 = vpop.permute.xlu0 %887
    %v890 = vmul.f32 %v880, %v888
    %892 = vrot.lane.b32.xlu0 %v890, 12
    %v893 = vpop.permute.xlu0 %892
    %v895 = vadd.f32 %v885, %v893
    %v896 = vtanh.pop %v895
    %898 = vrot.lane.b32.xlu0 %v896, 24
    %v899 = vpop.permute.xlu0 %898
    %v901 = vmul.f32 %v880, %v899
    %v902 = vpack.c.bf16 %v901, %v901
    %v904 = vrot.slane %v902, 1
    %905 = vrot.lane.b32.xlu0 %v904, 92
    %v906 = vpop.permute.xlu0 %905
    %v908 = vsel %vm751, %v906, 0
    %910 = vmatprep.subr.bf16.mxu0 0
    %911 = vmatpush1.bf16.msra.mxu0 %v757
    %912 = vmatprep.subr.bf16.mxu0 0
    %913 = vmatpush1.bf16.msra.mxu0 0
    %914 = vmatprep.subr.bf16.mxu0 0
    %915 = vmatpush1.bf16.msra.mxu0 0
    %916 = vmatprep.subr.bf16.mxu0 0
    %917 = vmatpush1.bf16.msra.mxu0 0
    %918 = vmatprep.subr.bf16.mxu0 0
    %919 = vmatpush1.bf16.msra.mxu0 0
    %920 = vmatprep.subr.bf16.mxu0 0
    %921 = vmatpush1.bf16.msra.mxu0 0
    %922 = vmatprep.subr.bf16.mxu0 0
    %923 = vmatpush1.bf16.msra.mxu0 0
    %924 = vmatprep.subr.bf16.mxu0 0
    %925 = vmatpush1.bf16.msra.mxu0 0
    %926 = vmatprep.subr.bf16.mxu0 0
    %927 = vmatpush1.bf16.msra.mxu0 0
    %928 = vmatprep.subr.bf16.mxu0 0
    %929 = vmatpush1.bf16.msra.mxu0 0
    %930 = vmatprep.subr.bf16.mxu0 0
    %931 = vmatpush1.bf16.msra.mxu0 0
    %932 = vmatprep.subr.bf16.mxu0 0
    %933 = vmatpush1.bf16.msra.mxu0 0
    %934 = vmatprep.subr.bf16.mxu0 0
    %935 = vmatpush1.bf16.msra.mxu0 0
    %936 = vmatprep.subr.bf16.mxu0 0
    %937 = vmatpush1.bf16.msra.mxu0 0
    %938 = vmatprep.subr.bf16.mxu0 0
    %939 = vmatpush1.bf16.msra.mxu0 0
    %940 = vmatprep.subr.bf16.mxu0 0
    %941 = vmatpush1.bf16.msra.mxu0 0
    %942 = vmatprep.mubr.bf16.mxu0 0
    %943 = vmatmul.mubr.bf16.gmra.mrb[0].mxu0 %v908
    %v944 = vpop.f32.mrb[0].mxu0
    %v945 = vadd.f32 0.0, %v944
    %v946 = vpop.f32.mrb[0].mxu0
    %v947 = vpop.f32.mrb[0].mxu0
    %v948 = vpop.f32.mrb[0].mxu0
    %949 = vdwg.mxu0
    %v951 = vrot.slane %v945, 4
    %v953 = vadd.f32 %v745, %v951
    %v954 = vxor.u32 %v953, 2147483648
    %v955 = vmul.f32 %v954, 1.442695
    %v956 = vpow.pop %v955
    %v957 = vadd.f32 %v956, 1.0
    %v958 = vrcp.pop %v957
    %v959 = vmul.f32 1.0, %v958
    %v960 = vtanh.pop %v953
    %v962 = vrot.slane %v895, 6
    %v964 = vmul.f32 %v959, %v962
    %966 = vrot.lane.b32.xlu0 %v960, 104
    %v967 = vpop.permute.xlu0 %966
    %v969 = vmul.f32 %v959, %v967
    %971 = vrot.lane.b32.xlu0 %v969, 12
    %v972 = vpop.permute.xlu0 %971
    %v974 = vadd.f32 %v964, %v972
    %v975 = vtanh.pop %v974
    %977 = vrot.lane.b32.xlu0 %v975, 24
    %v978 = vpop.permute.xlu0 %977
    %v980 = vmul.f32 %v959, %v978
    %v981 = vpack.c.bf16 %v980, %v980
    %v983 = vrot.slane %v981, 2
    %984 = vrot.lane.b32.xlu0 %v983, 92
    %v985 = vpop.permute.xlu0 %984
    %v987 = vsel %vm751, %v985, 0
    %989 = vmatprep.subr.bf16.mxu0 0
    %990 = vmatpush1.bf16.msra.mxu0 %v757
    %991 = vmatprep.subr.bf16.mxu0 0
    %992 = vmatpush1.bf16.msra.mxu0 0
    %993 = vmatprep.subr.bf16.mxu0 0
    %994 = vmatpush1.bf16.msra.mxu0 0
    %995 = vmatprep.subr.bf16.mxu0 0
    %996 = vmatpush1.bf16.msra.mxu0 0
    %997 = vmatprep.subr.bf16.mxu0 0
    %998 = vmatpush1.bf16.msra.mxu0 0
    %999 = vmatprep.subr.bf16.mxu0 0
    %1000 = vmatpush1.bf16.msra.mxu0 0
    %1001 = vmatprep.subr.bf16.mxu0 0
    %1002 = vmatpush1.bf16.msra.mxu0 0
    %1003 = vmatprep.subr.bf16.mxu0 0
    %1004 = vmatpush1.bf16.msra.mxu0 0
    %1005 = vmatprep.subr.bf16.mxu0 0
    %1006 = vmatpush1.bf16.msra.mxu0 0
    %1007 = vmatprep.subr.bf16.mxu0 0
    %1008 = vmatpush1.bf16.msra.mxu0 0
    %1009 = vmatprep.subr.bf16.mxu0 0
    %1010 = vmatpush1.bf16.msra.mxu0 0
    %1011 = vmatprep.subr.bf16.mxu0 0
    %1012 = vmatpush1.bf16.msra.mxu0 0
    %1013 = vmatprep.subr.bf16.mxu0 0
    %1014 = vmatpush1.bf16.msra.mxu0 0
    %1015 = vmatprep.subr.bf16.mxu0 0
    %1016 = vmatpush1.bf16.msra.mxu0 0
    %1017 = vmatprep.subr.bf16.mxu0 0
    %1018 = vmatpush1.bf16.msra.mxu0 0
    %1019 = vmatprep.subr.bf16.mxu0 0
    %1020 = vmatpush1.bf16.msra.mxu0 0
    %1021 = vmatprep.mubr.bf16.mxu0 0
    %1022 = vmatmul.mubr.bf16.gmra.mrb[0].mxu0 %v987
    %v1023 = vpop.f32.mrb[0].mxu0
    %v1024 = vadd.f32 0.0, %v1023
    %v1025 = vpop.f32.mrb[0].mxu0
    %v1026 = vpop.f32.mrb[0].mxu0
    %v1027 = vpop.f32.mrb[0].mxu0
    %1028 = vdwg.mxu0
    %v1030 = vrot.slane %v1024, 2
    %v1032 = vadd.f32 %v745, %v1030
    %v1033 = vxor.u32 %v1032, 2147483648
    %v1034 = vmul.f32 %v1033, 1.442695
    %v1035 = vpow.pop %v1034
    %v1036 = vadd.f32 %v1035, 1.0
    %v1037 = vrcp.pop %v1036
    %v1038 = vmul.f32 1.0, %v1037
    %v1039 = vtanh.pop %v1032
    %v1041 = vrot.slane %v974, 6
    %v1043 = vmul.f32 %v1038, %v1041
    %1045 = vrot.lane.b32.xlu0 %v1039, 104
    %v1046 = vpop.permute.xlu0 %1045
    %v1048 = vmul.f32 %v1038, %v1046
    %1050 = vrot.lane.b32.xlu0 %v1048, 12
    %v1051 = vpop.permute.xlu0 %1050
    %v1053 = vadd.f32 %v1043, %v1051
    %v1054 = vtanh.pop %v1053
    %1056 = vrot.lane.b32.xlu0 %v1054, 24
    %v1057 = vpop.permute.xlu0 %1056
    %v1059 = vmul.f32 %v1038, %v1057
    %v1060 = vpack.c.bf16 %v1059, %v1059
    %v1062 = vrot.slane %v1060, 3
    %1063 = vrot.lane.b32.xlu0 %v1062, 92
    %v1064 = vpop.permute.xlu0 %1063
    %v1066 = vsel %vm751, %v1064, 0
    %1068 = vmatprep.subr.bf16.mxu0 0
    %1069 = vmatpush1.bf16.msra.mxu0 %v757
    %1070 = vmatprep.subr.bf16.mxu0 0
    %1071 = vmatpush1.bf16.msra.mxu0 0
    %1072 = vmatprep.subr.bf16.mxu0 0
    %1073 = vmatpush1.bf16.msra.mxu0 0
    %1074 = vmatprep.subr.bf16.mxu0 0
    %1075 = vmatpush1.bf16.msra.mxu0 0
    %1076 = vmatprep.subr.bf16.mxu0 0
    %1077 = vmatpush1.bf16.msra.mxu0 0
    %1078 = vmatprep.subr.bf16.mxu0 0
    %1079 = vmatpush1.bf16.msra.mxu0 0
    %1080 = vmatprep.subr.bf16.mxu0 0
    %1081 = vmatpush1.bf16.msra.mxu0 0
    %1082 = vmatprep.subr.bf16.mxu0 0
    %1083 = vmatpush1.bf16.msra.mxu0 0
    %1084 = vmatprep.subr.bf16.mxu0 0
    %1085 = vmatpush1.bf16.msra.mxu0 0
    %1086 = vmatprep.subr.bf16.mxu0 0
    %1087 = vmatpush1.bf16.msra.mxu0 0
    %1088 = vmatprep.subr.bf16.mxu0 0
    %1089 = vmatpush1.bf16.msra.mxu0 0
    %1090 = vmatprep.subr.bf16.mxu0 0
    %1091 = vmatpush1.bf16.msra.mxu0 0
    %1092 = vmatprep.subr.bf16.mxu0 0
    %1093 = vmatpush1.bf16.msra.mxu0 0
    %1094 = vmatprep.subr.bf16.mxu0 0
    %1095 = vmatpush1.bf16.msra.mxu0 0
    %1096 = vmatprep.subr.bf16.mxu0 0
    %1097 = vmatpush1.bf16.msra.mxu0 0
    %1098 = vmatprep.subr.bf16.mxu0 0
    %1099 = vmatpush1.bf16.msra.mxu0 0
    %1100 = vmatprep.mubr.bf16.mxu0 0
    %1101 = vmatmul.mubr.bf16.gmra.mrb[0].mxu0 %v1066
    %v1102 = vpop.f32.mrb[0].mxu0
    %v1103 = vadd.f32 0.0, %v1102
    %v1104 = vpop.f32.mrb[0].mxu0
    %v1105 = vpop.f32.mrb[0].mxu0
    %v1106 = vpop.f32.mrb[0].mxu0
    %1107 = vdwg.mxu0
    %v1108 = vadd.f32 %v748, %v1103
    %v1109 = vxor.u32 %v1108, 2147483648
    %v1110 = vmul.f32 %v1109, 1.442695
    %v1111 = vpow.pop %v1110
    %v1112 = vadd.f32 %v1111, 1.0
    %v1113 = vrcp.pop %v1112
    %v1114 = vmul.f32 1.0, %v1113
    %v1115 = vtanh.pop %v1108
    %v1117 = vrot.slane %v1053, 6
    %v1119 = vmul.f32 %v1114, %v1117
    %1121 = vrot.lane.b32.xlu0 %v1115, 104
    %v1122 = vpop.permute.xlu0 %1121
    %v1124 = vmul.f32 %v1114, %v1122
    %1126 = vrot.lane.b32.xlu0 %v1124, 12
    %v1127 = vpop.permute.xlu0 %1126
    %v1129 = vadd.f32 %v1119, %v1127
    %v1130 = vtanh.pop %v1129
    %1132 = vrot.lane.b32.xlu0 %v1130, 24
    %v1133 = vpop.permute.xlu0 %1132
    %v1135 = vmul.f32 %v1114, %v1133
    %v1136 = vpack.c.bf16 %v1135, %v1135
    %1138 = vrot.lane.b32.xlu0 %v1136, 92
    %v1139 = vpop.permute.xlu0 %1138
    %v1141 = vsel %vm751, %v1139, 0
    %1143 = vmatprep.subr.bf16.mxu0 0
    %1144 = vmatpush1.bf16.msra.mxu0 %v757
    %1145 = vmatprep.subr.bf16.mxu0 0
    %1146 = vmatpush1.bf16.msra.mxu0 0
    %1147 = vmatprep.subr.bf16.mxu0 0
    %1148 = vmatpush1.bf16.msra.mxu0 0
    %1149 = vmatprep.subr.bf16.mxu0 0
    %1150 = vmatpush1.bf16.msra.mxu0 0
    %1151 = vmatprep.subr.bf16.mxu0 0
    %1152 = vmatpush1.bf16.msra.mxu0 0
    %1153 = vmatprep.subr.bf16.mxu0 0
    %1154 = vmatpush1.bf16.msra.mxu0 0
    %1155 = vmatprep.subr.bf16.mxu0 0
    %1156 = vmatpush1.bf16.msra.mxu0 0
    %1157 = vmatprep.subr.bf16.mxu0 0
    %1158 = vmatpush1.bf16.msra.mxu0 0
    %1159 = vmatprep.subr.bf16.mxu0 0
    %1160 = vmatpush1.bf16.msra.mxu0 0
    %1161 = vmatprep.subr.bf16.mxu0 0
    %1162 = vmatpush1.bf16.msra.mxu0 0
    %1163 = vmatprep.subr.bf16.mxu0 0
    %1164 = vmatpush1.bf16.msra.mxu0 0
    %1165 = vmatprep.subr.bf16.mxu0 0
    %1166 = vmatpush1.bf16.msra.mxu0 0
    %1167 = vmatprep.subr.bf16.mxu0 0
    %1168 = vmatpush1.bf16.msra.mxu0 0
    %1169 = vmatprep.subr.bf16.mxu0 0
    %1170 = vmatpush1.bf16.msra.mxu0 0
    %1171 = vmatprep.subr.bf16.mxu0 0
    %1172 = vmatpush1.bf16.msra.mxu0 0
    %1173 = vmatprep.subr.bf16.mxu0 0
    %1174 = vmatpush1.bf16.msra.mxu0 0
    %1175 = vmatprep.mubr.bf16.mxu0 0
    %1176 = vmatmul.mubr.bf16.gmra.mrb[0].mxu0 %v1141
    %v1177 = vpop.f32.mrb[0].mxu0
    %v1178 = vadd.f32 0.0, %v1177
    %v1179 = vpop.f32.mrb[0].mxu0
    %v1180 = vpop.f32.mrb[0].mxu0
    %v1181 = vpop.f32.mrb[0].mxu0
    %1182 = vdwg.mxu0
    %v1184 = vrot.slane %v1178, 6
    %v1186 = vadd.f32 %v748, %v1184
    %v1187 = vxor.u32 %v1186, 2147483648
    %v1188 = vmul.f32 %v1187, 1.442695
    %v1189 = vpow.pop %v1188
    %v1190 = vadd.f32 %v1189, 1.0
    %v1191 = vrcp.pop %v1190
    %v1192 = vmul.f32 1.0, %v1191
    %v1193 = vtanh.pop %v1186
    %v1195 = vrot.slane %v1129, 6
    %v1197 = vmul.f32 %v1192, %v1195
    %1199 = vrot.lane.b32.xlu0 %v1193, 104
    %v1200 = vpop.permute.xlu0 %1199
    %v1202 = vmul.f32 %v1192, %v1200
    %1204 = vrot.lane.b32.xlu0 %v1202, 12
    %v1205 = vpop.permute.xlu0 %1204
    %v1207 = vadd.f32 %v1197, %v1205
    %v1208 = vtanh.pop %v1207
    %1210 = vrot.lane.b32.xlu0 %v1208, 24
    %v1211 = vpop.permute.xlu0 %1210
    %v1213 = vmul.f32 %v1192, %v1211
    %v1214 = vpack.c.bf16 %v1213, %v1213
    %v1216 = vrot.slane %v1214, 1
    %1217 = vrot.lane.b32.xlu0 %v1216, 92
    %v1218 = vpop.permute.xlu0 %1217
    %v1220 = vsel %vm751, %v1218, 0
    %1222 = vmatprep.subr.bf16.mxu0 0
    %1223 = vmatpush1.bf16.msra.mxu0 %v757
    %1224 = vmatprep.subr.bf16.mxu0 0
    %1225 = vmatpush1.bf16.msra.mxu0 0
    %1226 = vmatprep.subr.bf16.mxu0 0
    %1227 = vmatpush1.bf16.msra.mxu0 0
    %1228 = vmatprep.subr.bf16.mxu0 0
    %1229 = vmatpush1.bf16.msra.mxu0 0
    %1230 = vmatprep.subr.bf16.mxu0 0
    %1231 = vmatpush1.bf16.msra.mxu0 0
    %1232 = vmatprep.subr.bf16.mxu0 0
    %1233 = vmatpush1.bf16.msra.mxu0 0
    %1234 = vmatprep.subr.bf16.mxu0 0
    %1235 = vmatpush1.bf16.msra.mxu0 0
    %1236 = vmatprep.subr.bf16.mxu0 0
    %1237 = vmatpush1.bf16.msra.mxu0 0
    %1238 = vmatprep.subr.bf16.mxu0 0
    %1239 = vmatpush1.bf16.msra.mxu0 0
    %1240 = vmatprep.subr.bf16.mxu0 0
    %1241 = vmatpush1.bf16.msra.mxu0 0
    %1242 = vmatprep.subr.bf16.mxu0 0
    %1243 = vmatpush1.bf16.msra.mxu0 0
    %1244 = vmatprep.subr.bf16.mxu0 0
    %1245 = vmatpush1.bf16.msra.mxu0 0
    %1246 = vmatprep.subr.bf16.mxu0 0
    %1247 = vmatpush1.bf16.msra.mxu0 0
    %1248 = vmatprep.subr.bf16.mxu0 0
    %1249 = vmatpush1.bf16.msra.mxu0 0
    %1250 = vmatprep.subr.bf16.mxu0 0
    %1251 = vmatpush1.bf16.msra.mxu0 0
    %1252 = vmatprep.subr.bf16.mxu0 0
    %1253 = vmatpush1.bf16.msra.mxu0 0
    %1254 = vmatprep.mubr.bf16.mxu0 0
    %1255 = vmatmul.mubr.bf16.gmra.mrb[0].mxu0 %v1220
    %v1256 = vpop.f32.mrb[0].mxu0
    %v1257 = vadd.f32 0.0, %v1256
    %v1258 = vpop.f32.mrb[0].mxu0
    %v1259 = vpop.f32.mrb[0].mxu0
    %v1260 = vpop.f32.mrb[0].mxu0
    %1261 = vdwg.mxu0
    %v1263 = vrot.slane %v1257, 4
    %v1265 = vadd.f32 %v748, %v1263
    %v1266 = vxor.u32 %v1265, 2147483648
    %v1267 = vmul.f32 %v1266, 1.442695
    %v1268 = vpow.pop %v1267
    %v1269 = vadd.f32 %v1268, 1.0
    %v1270 = vrcp.pop %v1269
    %v1271 = vmul.f32 1.0, %v1270
    %v1272 = vtanh.pop %v1265
    %v1274 = vrot.slane %v1207, 6
    %v1276 = vmul.f32 %v1271, %v1274
    %1278 = vrot.lane.b32.xlu0 %v1272, 104
    %v1279 = vpop.permute.xlu0 %1278
    %v1281 = vmul.f32 %v1271, %v1279
    %1283 = vrot.lane.b32.xlu0 %v1281, 12
    %v1284 = vpop.permute.xlu0 %1283
    %v1286 = vadd.f32 %v1276, %v1284
    %v1287 = vtanh.pop %v1286
    %1289 = vrot.lane.b32.xlu0 %v1287, 24
    %v1290 = vpop.permute.xlu0 %1289
    %v1292 = vmul.f32 %v1271, %v1290
    %v1293 = vpack.c.bf16 %v1292, %v1292
    %v1295 = vrot.slane %v1293, 2
    %1296 = vrot.lane.b32.xlu0 %v1295, 92
    %v1297 = vpop.permute.xlu0 %1296
    %v1299 = vsel %vm751, %v1297, 0
    %1301 = vmatprep.subr.bf16.mxu0 0
    %1302 = vmatpush1.bf16.msra.mxu0 %v757
    %1303 = vmatprep.subr.bf16.mxu0 0
    %1304 = vmatpush1.bf16.msra.mxu0 0
    %1305 = vmatprep.subr.bf16.mxu0 0
    %1306 = vmatpush1.bf16.msra.mxu0 0
    %1307 = vmatprep.subr.bf16.mxu0 0
    %1308 = vmatpush1.bf16.msra.mxu0 0
    %1309 = vmatprep.subr.bf16.mxu0 0
    %1310 = vmatpush1.bf16.msra.mxu0 0
    %1311 = vmatprep.subr.bf16.mxu0 0
    %1312 = vmatpush1.bf16.msra.mxu0 0
    %1313 = vmatprep.subr.bf16.mxu0 0
    %1314 = vmatpush1.bf16.msra.mxu0 0
    %1315 = vmatprep.subr.bf16.mxu0 0
    %1316 = vmatpush1.bf16.msra.mxu0 0
    %1317 = vmatprep.subr.bf16.mxu0 0
    %1318 = vmatpush1.bf16.msra.mxu0 0
    %1319 = vmatprep.subr.bf16.mxu0 0
    %1320 = vmatpush1.bf16.msra.mxu0 0
    %1321 = vmatprep.subr.bf16.mxu0 0
    %1322 = vmatpush1.bf16.msra.mxu0 0
    %1323 = vmatprep.subr.bf16.mxu0 0
    %1324 = vmatpush1.bf16.msra.mxu0 0
    %1325 = vmatprep.subr.bf16.mxu0 0
    %1326 = vmatpush1.bf16.msra.mxu0 0
    %1327 = vmatprep.subr.bf16.mxu0 0
    %1328 = vmatpush1.bf16.msra.mxu0 0
    %1329 = vmatprep.subr.bf16.mxu0 0
    %1330 = vmatpush1.bf16.msra.mxu0 0
    %1331 = vmatprep.subr.bf16.mxu0 0
    %1332 = vmatpush1.bf16.msra.mxu0 0
    %1333 = vmatprep.mubr.bf16.mxu0 0
    %1334 = vmatmul.mubr.bf16.gmra.mrb[0].mxu0 %v1299
    %v1335 = vpop.f32.mrb[0].mxu0
    %v1336 = vadd.f32 0.0, %v1335
    %v1337 = vpop.f32.mrb[0].mxu0
    %v1338 = vpop.f32.mrb[0].mxu0
    %v1339 = vpop.f32.mrb[0].mxu0
    %1340 = vdwg.mxu0
    %v1342 = vrot.slane %v1336, 2
    %v1344 = vadd.f32 %v748, %v1342
    %v1345 = vxor.u32 %v1344, 2147483648
    %v1346 = vmul.f32 %v1345, 1.442695
    %v1347 = vpow.pop %v1346
    %v1348 = vadd.f32 %v1347, 1.0
    %v1349 = vrcp.pop %v1348
    %v1350 = vmul.f32 1.0, %v1349
    %v1351 = vtanh.pop %v1344
    %v1353 = vrot.slane %v1286, 6
    %v1355 = vmul.f32 %v1350, %v1353
    %1357 = vrot.lane.b32.xlu0 %v1351, 104
    %v1358 = vpop.permute.xlu0 %1357
    %v1360 = vmul.f32 %v1350, %v1358
    %1362 = vrot.lane.b32.xlu0 %v1360, 12
    %v1363 = vpop.permute.xlu0 %1362
    %v1365 = vadd.f32 %v1355, %v1363
    %v1366 = vtanh.pop %v1365
    %1368 = vrot.lane.b32.xlu0 %v1366, 24
    %v1369 = vpop.permute.xlu0 %1368
    %v1371 = vmul.f32 %v1350, %v1369
    %v1374 = vunpack.c.l.s4 1966171168
    %v1375 = vunpack.c.0.s8 %v1374
    %v1376 = vlaneseq
    %v1377 = vshrl.u32 %v1376, 7
    %v1378 = vsub.s32 %v1375, %v1377
    %v1379 = vrot.slane %v823, %v1378
    %v1380 = vcombine.high %v1379, %v1379
    %v1382 = vunpack.c.l.s4 1966171168
    %v1383 = vunpack.c.0.s8 %v1382
    %v1384 = vlaneseq
    %v1385 = vshrl.u32 %v1384, 7
    %v1386 = vsub.s32 %v1383, %v1385
    %v1387 = vrot.slane %v1379, %v1386
    %v1389 = vunpack.c.l.s4 1966171168
    %v1390 = vunpack.c.0.s8 %v1389
    %v1391 = vlaneseq
    %v1392 = vshrl.u32 %v1391, 7
    %v1393 = vsub.s32 %v1390, %v1392
    %v1394 = vrot.slane %v1380, %v1393
    %v1399 = vunpack.c.l.s4 1966171168
    %v1400 = vunpack.c.0.s8 %v1399
    %v1401 = vlaneseq
    %v1402 = vshrl.u32 %v1401, 7
    %v1403 = vsub.s32 %v1400, %v1402
    %v1404 = vrot.slane %v901, %v1403
    %v1405 = vcombine.high %v1404, %v1404
    %v1407 = vunpack.c.l.s4 1966171168
    %v1408 = vunpack.c.0.s8 %v1407
    %v1409 = vlaneseq
    %v1410 = vshrl.u32 %v1409, 7
    %v1411 = vsub.s32 %v1408, %v1410
    %v1412 = vrot.slane %v1404, %v1411
    %v1414 = vunpack.c.l.s4 1966171168
    %v1415 = vunpack.c.0.s8 %v1414
    %v1416 = vlaneseq
    %v1417 = vshrl.u32 %v1416, 7
    %v1418 = vsub.s32 %v1415, %v1417
    %v1419 = vrot.slane %v1405, %v1418
    %v1420 = vcombine.high %v1412, %v1412
    %v1421 = vcombine.high %v1419, %v1419
    %v1423 = vcombine.high %v980, %v980
    %v1425 = vunpack.c.l.s4 1966171168
    %v1426 = vunpack.c.0.s8 %v1425
    %v1427 = vlaneseq
    %v1428 = vshrl.u32 %v1427, 7
    %v1429 = vsub.s32 %v1426, %v1428
    %v1430 = vrot.slane %v1423, %v1429
    %v1431 = vcombine.high %v1430, %v1430
    %v1433 = vunpack.c.l.s4 1966171168
    %v1434 = vunpack.c.0.s8 %v1433
    %v1435 = vlaneseq
    %v1436 = vshrl.u32 %v1435, 7
    %v1437 = vsub.s32 %v1434, %v1436
    %v1438 = vrot.slane %v1430, %v1437
    %v1440 = vunpack.c.l.s4 1966171168
    %v1441 = vunpack.c.0.s8 %v1440
    %v1442 = vlaneseq
    %v1443 = vshrl.u32 %v1442, 7
    %v1444 = vsub.s32 %v1441, %v1443
    %v1445 = vrot.slane %v1431, %v1444
    %v1447 = vcombine.high %v1059, %v1059
    %v1449 = vunpack.c.l.s4 1966171168
    %v1450 = vunpack.c.0.s8 %v1449
    %v1451 = vlaneseq
    %v1452 = vshrl.u32 %v1451, 7
    %v1453 = vsub.s32 %v1450, %v1452
    %v1454 = vrot.slane %v1447, %v1453
    %v1455 = vcombine.high %v1454, %v1454
    %v1457 = vunpack.c.l.s4 1966171168
    %v1458 = vunpack.c.0.s8 %v1457
    %v1459 = vlaneseq
    %v1460 = vshrl.u32 %v1459, 7
    %v1461 = vsub.s32 %v1458, %v1460
    %v1462 = vrot.slane %v1454, %v1461
    %v1464 = vunpack.c.l.s4 1966171168
    %v1465 = vunpack.c.0.s8 %v1464
    %v1466 = vlaneseq
    %v1467 = vshrl.u32 %v1466, 7
    %v1468 = vsub.s32 %v1465, %v1467
    %v1469 = vrot.slane %v1455, %v1468
    %v1470 = vcombine.high %v1462, %v1462
    %v1471 = vcombine.high %v1469, %v1469
    %v1474 = vunpack.c.l.s4 1966171168
    %v1475 = vunpack.c.0.s8 %v1474
    %v1476 = vlaneseq
    %v1477 = vshrl.u32 %v1476, 7
    %v1478 = vsub.s32 %v1475, %v1477
    %v1479 = vrot.slane %v1135, %v1478
    %v1480 = vcombine.high %v1479, %v1479
    %v1482 = vunpack.c.l.s4 1966171168
    %v1483 = vunpack.c.0.s8 %v1482
    %v1484 = vlaneseq
    %v1485 = vshrl.u32 %v1484, 7
    %v1486 = vsub.s32 %v1483, %v1485
    %v1487 = vrot.slane %v1479, %v1486
    %v1489 = vunpack.c.l.s4 1966171168
    %v1490 = vunpack.c.0.s8 %v1489
    %v1491 = vlaneseq
    %v1492 = vshrl.u32 %v1491, 7
    %v1493 = vsub.s32 %v1490, %v1492
    %v1494 = vrot.slane %v1480, %v1493
    %v1497 = vunpack.c.l.s4 1966171168
    %v1498 = vunpack.c.0.s8 %v1497
    %v1499 = vlaneseq
    %v1500 = vshrl.u32 %v1499, 7
    %v1501 = vsub.s32 %v1498, %v1500
    %v1502 = vrot.slane %v1213, %v1501
    %v1503 = vcombine.high %v1502, %v1502
    %v1505 = vunpack.c.l.s4 1966171168
    %v1506 = vunpack.c.0.s8 %v1505
    %v1507 = vlaneseq
    %v1508 = vshrl.u32 %v1507, 7
    %v1509 = vsub.s32 %v1506, %v1508
    %v1510 = vrot.slane %v1502, %v1509
    %v1512 = vunpack.c.l.s4 1966171168
    %v1513 = vunpack.c.0.s8 %v1512
    %v1514 = vlaneseq
    %v1515 = vshrl.u32 %v1514, 7
    %v1516 = vsub.s32 %v1513, %v1515
    %v1517 = vrot.slane %v1503, %v1516
    %v1518 = vcombine.high %v1510, %v1510
    %v1519 = vcombine.high %v1517, %v1517
    %v1521 = vcombine.high %v1292, %v1292
    %v1523 = vunpack.c.l.s4 1966171168
    %v1524 = vunpack.c.0.s8 %v1523
    %v1525 = vlaneseq
    %v1526 = vshrl.u32 %v1525, 7
    %v1527 = vsub.s32 %v1524, %v1526
    %v1528 = vrot.slane %v1521, %v1527
    %v1529 = vcombine.high %v1528, %v1528
    %v1531 = vunpack.c.l.s4 1966171168
    %v1532 = vunpack.c.0.s8 %v1531
    %v1533 = vlaneseq
    %v1534 = vshrl.u32 %v1533, 7
    %v1535 = vsub.s32 %v1532, %v1534
    %v1536 = vrot.slane %v1528, %v1535
    %v1538 = vunpack.c.l.s4 1966171168
    %v1539 = vunpack.c.0.s8 %v1538
    %v1540 = vlaneseq
    %v1541 = vshrl.u32 %v1540, 7
    %v1542 = vsub.s32 %v1539, %v1541
    %v1543 = vrot.slane %v1529, %v1542
    %v1545 = vcombine.high %v1371, %v1371
    %v1547 = vunpack.c.l.s4 1966171168
    %v1548 = vunpack.c.0.s8 %v1547
    %v1549 = vlaneseq
    %v1550 = vshrl.u32 %v1549, 7
    %v1551 = vsub.s32 %v1548, %v1550
    %v1552 = vrot.slane %v1545, %v1551
    %v1553 = vcombine.high %v1552, %v1552
    %v1555 = vunpack.c.l.s4 1966171168
    %v1556 = vunpack.c.0.s8 %v1555
    %v1557 = vlaneseq
    %v1558 = vshrl.u32 %v1557, 7
    %v1559 = vsub.s32 %v1556, %v1558
    %v1560 = vrot.slane %v1552, %v1559
    %v1562 = vunpack.c.l.s4 1966171168
    %v1563 = vunpack.c.0.s8 %v1562
    %v1564 = vlaneseq
    %v1565 = vshrl.u32 %v1564, 7
    %v1566 = vsub.s32 %v1563, %v1565
    %v1567 = vrot.slane %v1553, %v1566
    %v1568 = vcombine.high %v1560, %v1560
    %v1569 = vcombine.high %v1567, %v1567
    %v1570 = vlaneseq
    %v1571 = vshrl.u32 %v1570, 7
    %v1572 = vsub.s32 0, %v1571
    %v1573 = vrot.slane %v1420, %v1572
    %v1574 = vlaneseq
    %v1575 = vshrl.u32 %v1574, 7
    %v1576 = vsub.s32 0, %v1575
    %v1577 = vrot.slane %v1421, %v1576
    %v1580 = vlaneseq
    %v1581 = vshrl.u32 %v1580, 7
    %v1582 = vsub.s32 0, %v1581
    %v1583 = vrot.slane %v1438, %v1582
    %v1584 = vlaneseq
    %v1585 = vshrl.u32 %v1584, 7
    %v1586 = vsub.s32 0, %v1585
    %v1587 = vrot.slane %v1445, %v1586
    %v1590 = vlaneseq
    %v1591 = vshrl.u32 %v1590, 7
    %v1592 = vsub.s32 0, %v1591
    %v1593 = vrot.slane %v1470, %v1592
    %v1594 = vlaneseq
    %v1595 = vshrl.u32 %v1594, 7
    %v1596 = vsub.s32 0, %v1595
    %v1597 = vrot.slane %v1471, %v1596
    %v1600 = vlaneseq
    %v1601 = vshrl.u32 %v1600, 7
    %v1602 = vsub.s32 0, %v1601
    %v1603 = vrot.slane %v1487, %v1602
    %v1604 = vlaneseq
    %v1605 = vshrl.u32 %v1604, 7
    %v1606 = vsub.s32 0, %v1605
    %v1607 = vrot.slane %v1494, %v1606
    %v1610 = vlaneseq
    %v1611 = vshrl.u32 %v1610, 7
    %v1612 = vsub.s32 0, %v1611
    %v1613 = vrot.slane %v1518, %v1612
    %v1614 = vlaneseq
    %v1615 = vshrl.u32 %v1614, 7
    %v1616 = vsub.s32 0, %v1615
    %v1617 = vrot.slane %v1519, %v1616
    %v1620 = vlaneseq
    %v1621 = vshrl.u32 %v1620, 7
    %v1622 = vsub.s32 0, %v1621
    %v1623 = vrot.slane %v1536, %v1622
    %v1624 = vlaneseq
    %v1625 = vshrl.u32 %v1624, 7
    %v1626 = vsub.s32 0, %v1625
    %v1627 = vrot.slane %v1543, %v1626
    %v1630 = vlaneseq
    %v1631 = vshrl.u32 %v1630, 7
    %v1632 = vsub.s32 0, %v1631
    %v1633 = vrot.slane %v1568, %v1632
    %v1634 = vlaneseq
    %v1635 = vshrl.u32 %v1634, 7
    %v1636 = vsub.s32 0, %v1635
    %v1637 = vrot.slane %v1569, %v1636
    %v1640 = vsel %vm642, %v1387, %v1573
    %v1641 = vsel %vm642, %v1394, %v1577
    %vm1642 = vcmask 1041408
    %v1643 = vsel %vm1642, %v1640, %v1583
    %v1644 = vsel %vm1642, %v1641, %v1587
    %vm1645 = vcmask 1042432
    %v1646 = vsel %vm1645, %v1643, %v1593
    %v1647 = vsel %vm1645, %v1644, %v1597
    %v1648 = vsel %vm706, %v1646, %v1603
    %v1649 = vsel %vm706, %v1647, %v1607
    %vm1650 = vcmask 1044480
    %v1651 = vsel %vm1650, %v1648, %v1613
    %v1652 = vsel %vm1650, %v1649, %v1617
    %v1653 = vsel %vm755, %v1651, %v1623
    %v1654 = vsel %vm755, %v1652, %v1627
    %vm1655 = vcmask 1046528
    %v1656 = vsel %vm1655, %v1653, %v1633
    %v1657 = vsel %vm1655, %v1654, %v1637
    %1660 = vrot.lane.b32.xlu0 %v1656, 92
    %v1661 = vpop.permute.xlu0 %1660
    %1662 = vrot.lane.b32.xlu0 %v1657, 92
    %v1663 = vpop.permute.xlu0 %1662
    %1666 = vst.msk [vmem:[#allocation14] sm:$0xff] %vm751, %v1661
    %1667 = vst.msk [vmem:[#allocation14 + $0x8] sm:$0xff] %vm751, %v1663
    %v1668 = vld [vmem:[%s10] sm:$0xff]
    %v1669 = vld [vmem:[%s10 + $0x8] sm:$0xff]
    %v1670 = vlaneseq
    %v1671 = vand.u32 %v1670, 127
    %1672 = vset.pattern.permute.xlu0 0
    %1673 = vperm.xlu0 %1672, %v1668
    %v1674 = vpop.permute.xlu0 %1673
    %1675 = vset.pattern.permute.xlu0 0
    %1676 = vperm.xlu0 %1675, %v1669
    %v1677 = vpop.permute.xlu0 %1676
    %vm1678 = vcmp.eq.s32.totalorder %v1671, %v1674
    %vm1679 = vcmp.eq.s32.totalorder %v1671, %v1677
    %v1680 = vsel %vm1678, 1, 0
    %v1681 = vsel %vm1679, 1, 0
    %v1682 = vcvt.s32.f32 %v1680
    %v1683 = vcvt.s32.f32 %v1681
    %vm1684 = vcmask 392480
    %v1685 = vsel %vm1684, %v1656, -inf
    %1686 = vmax.xlane.f32.xlu0 %v1685
    %v1687 = vpop.xlane.xlu0 %1686
    %v1688 = vsel %vm1684, %v1657, -inf
    %1689 = vmax.xlane.f32.xlu0 %v1688
    %v1690 = vpop.xlane.xlu0 %1689
    %v1691 = vsub.f32 %v1656, %v1687
    %v1692 = vsub.f32 %v1657, %v1690
    %v1693 = vmul.f32 %v1691, 1.442695
    %v1694 = vpow.pop %v1693
    %v1695 = vmul.f32 %v1692, 1.442695
    %v1696 = vpow.pop %v1695
    %1699 = vrot.lane.b32.xlu0 %v1694, 92
    %v1700 = vpop.permute.xlu0 %1699
    %1701 = vrot.lane.b32.xlu0 %v1696, 92
    %v1702 = vpop.permute.xlu0 %1701
    %v1705 = vsel %vm751, %v1700, 0.0
    %1706 = vadd.xlane.f32.xlu0 %v1705
    %v1707 = vpop.xlane.xlu0 %1706
    %v1708 = vsel %vm751, %v1702, 0.0
    %1709 = vadd.xlane.f32.xlu0 %v1708
    %v1710 = vpop.xlane.xlu0 %1709
    %v1711 = vlog2.pop %v1707
    %v1712 = vmul.f32 %v1711, 0.6931472
    %v1713 = vlog2.pop %v1710
    %v1714 = vmul.f32 %v1713, 0.6931472
    %v1715 = vadd.f32 %v1687, %v1712
    %v1716 = vadd.f32 %v1690, %v1714
    %1719 = vrot.lane.b32.xlu0 %v1682, 36
    %v1720 = vpop.permute.xlu0 %1719
    %1721 = vrot.lane.b32.xlu0 %v1683, 36
    %v1722 = vpop.permute.xlu0 %1721
    %v1725 = vmul.f32 %v1656, %v1720
    %v1726 = vmul.f32 %v1657, %v1722
    %1729 = vrot.lane.b32.xlu0 %v1725, 92
    %v1730 = vpop.permute.xlu0 %1729
    %1731 = vrot.lane.b32.xlu0 %v1726, 92
    %v1732 = vpop.permute.xlu0 %1731
    %v1735 = vsel %vm751, %v1730, 0.0
    %1736 = vadd.xlane.f32.xlu0 %v1735
    %v1737 = vpop.xlane.xlu0 %1736
    %v1738 = vsel %vm751, %v1732, 0.0
    %1739 = vadd.xlane.f32.xlu0 %v1738
    %v1740 = vpop.xlane.xlu0 %1739
    %v1741 = vsub.f32 %v1715, %v1737
    %v1742 = vsub.f32 %v1716, %v1740
    %v1743 = vmul.f32 %v1741, %v307
    %v1744 = vmul.f32 %v1742, %v440
    %vm1745 = vcmask 7168
    %v1746 = vsel %vm1745, %v1743, 0.0
    %v1747 = vsel %vm1745, %v1744, 0.0
    %v1748 = vadd.f32 %v1746, %v1747
    %1749 = vadd.xlane.f32.xlu0 %v1748
    %v1750 = vpop.xlane.xlu0 %1749
    %v1751 = vrot.slane %v1750, 4
    %v1752 = vadd.f32 %v1750, %v1751
    %v1753 = vrot.slane %v1752, 2
    %v1754 = vadd.f32 %v1752, %v1753
    %v1755 = vrot.slane %v1754, 1
    %v1756 = vadd.f32 %v1754, %v1755
    %s1757 = vtos %v1756
    %v1758 = vrcp.pop 2.0
    %s1759 = vtos %v1758
    %s1760 = smul.f32 %s1757, %s1759
    %v1761 = vrcp.pop 2.0
    %s1762 = vtos %v1761
    %s1763 = smul.f32 %s488, %s1762
    %s1764 = smul.f32 %s1763, 0.5
    %s1765 = sadd.f32 %s1760, %s1764
    %v1766 = vstv %s1765
    %vm1767 = vcmask 0
    %1768 = vst.msk [vmem:[#allocation13] sm:$0x1] %vm1767, %v1766
    // Predicated region
    $region62: #{tpu_custom_call.1} parent=1 // pred_check
      _
    $region63: #{tpu_custom_call.1} parent=1 // pred_check_branch
      %1770 = sbr.rel (0) target = $region65
    $region64: #{tpu_custom_call.1} parent=1 // pred_region
      %s1772 = ssub.s32 16, 16
      %1773 = vsyncadd [#allocation6], %s1772
      %s1775 = sshll.u32 [#allocation13], 4
      %s1776 = int_to_ptr.vmem [resolvable:$true] %s1775
      %1778 = dma.vmem_to_hbm [thread:$0]  %s1776, 16, %s11, [#allocation6]
    $region65: #{tpu_custom_call.1} parent=1 // pred_fallthru
      _
    // Predicated region
    $region66: #{tpu_custom_call.1} parent=1 // pred_check
      _
    $region67: #{tpu_custom_call.1} parent=1 // pred_check_branch
      %1780 = sbr.rel (0) target = $region69
    $region68: #{tpu_custom_call.1} parent=1 // pred_region
      %s1782 = ssub.s32 256, 256
      %1783 = vsyncadd [#allocation15], %s1782
      %s1784 = sshll.u32 [#allocation14], 4
      %s1785 = int_to_ptr.vmem [resolvable:$true] %s1784
      %1790 = dma.vmem_to_hbm [thread:$0]  %s1785, 256, %s12, [#allocation15], 128, 128, 8
    $region69: #{tpu_custom_call.1} parent=1 // pred_fallthru
      _
    // Predicated region
    $region70: #{tpu_custom_call.1} parent=1 // pred_check
      _
    $region71: #{tpu_custom_call.1} parent=1 // pred_check_branch
      %1792 = sbr.rel (0) target = $region73
    $region72: #{tpu_custom_call.1} parent=1 // pred_region
      %1793 = dma.done [#allocation6], 16
    $region73: #{tpu_custom_call.1} parent=1 // pred_fallthru
      _
    // Predicated region
    $region74: #{tpu_custom_call.1} parent=1 // pred_check
      _
    $region75: #{tpu_custom_call.1} parent=1 // pred_check_branch
      %1795 = sbr.rel (0) target = $region77
    $region76: #{tpu_custom_call.1} parent=1 // pred_region
      %1796 = dma.done [#allocation15], 256
    $region77: #{tpu_custom_call.1} parent=1 // pred_fallthru
      _
    %1797 = vsyncpa [#allocation5], 1
    %1798 = vsyncpa [#allocation8], 1
    %1799 = vsyncpa [#allocation11], 1
    %1800 = vsyncpa [#allocation6], 1
    %1801 = vsyncpa [#allocation15], 1

</llo_original>
